<compile_context>
chip_gen: v7x
topology: tpu7x:2x2x1
jax: 0.10.0
libtpu: 0.0.40
codegen_flags: <defaults>
</compile_context>

<pallas_src>
import functools

import jax
import jax.numpy as jnp
from jax.experimental import pallas as pl
from jax.experimental.pallas import tpu as pltpu

# ---- model dims (small, TPU-aligned) ----------------------------------------
B, S, D, H, F = 2, 8, 128, 4, 256          # batch, seq, d_model, heads, ffn dim
HD = D // H
N = B * S                                   # flattened token count
WCAT = 3 * D + D + F                        # wqkv | wo | w1 packed width (768)
VECW = 3 * D                                # bias/LN slab width (384)
EPS = 1e-5                                  # nn.LayerNorm default eps


# ---- in-kernel helpers -------------------------------------------------------
def _layer_norm(x, gamma, beta):
    mu = jnp.mean(x, axis=-1, keepdims=True)
    var = jnp.mean((x - mu) ** 2, axis=-1, keepdims=True)
    return (x - mu) * jax.lax.rsqrt(var + EPS) * gamma + beta


def _softmax(x):
    # f32 softmax (v5e has no bf16 VALU/EUP); divide on the EUP via reciprocal.
    m = jnp.max(x, axis=-1, keepdims=True)
    e = jnp.exp(x - m)
    inv = pl.reciprocal(jnp.sum(e, axis=-1, keepdims=True), approx=True)
    return e * inv


def _transformer_block(x, wcat, w2, vec):
    """One post-LN transformer block on flattened tokens x: [N, D] f32.

    wcat : [D, 3D+D+F] bf16  = [ wqkv (Q cols pre-scaled) | wo | w1 ]
    w2   : [F, D]      bf16
    vec  : [8, 3D]     f32   rows: 0 bqkv(scaled q) | 1 b1(+pad) | 2 bo,ln1_g,ln1_b | 3 b2,ln2_g,ln2_b
    """
    wqkv = wcat[:, 0:3 * D]
    wo = wcat[:, 3 * D:4 * D]
    w1 = wcat[:, 4 * D:4 * D + F]

    bqkv = vec[0:1, :]                       # [1, 3D]
    b1 = vec[1:2, 0:F]                       # [1, F]
    bo, ln1_g, ln1_b = vec[2:3, 0:D], vec[2:3, D:2 * D], vec[2:3, 2 * D:3 * D]
    b2, ln2_g, ln2_b = vec[3:4, 0:D], vec[3:4, D:2 * D], vec[3:4, 2 * D:3 * D]

    # --- fused QKV projection (bf16 operands, f32 accumulation) ---
    qkv = jnp.dot(x.astype(jnp.bfloat16), wqkv,
                  preferred_element_type=jnp.float32) + bqkv          # [N, 3D]
    q = qkv[:, 0 * D:1 * D].astype(jnp.bfloat16).reshape(B, S, D)
    k = qkv[:, 1 * D:2 * D].astype(jnp.bfloat16).reshape(B, S, D)
    v = qkv[:, 2 * D:3 * D].astype(jnp.bfloat16).reshape(B, S, D)

    # --- multi-head attention; scale already folded into Q weights/bias ---
    ctxs = []
    for h in range(H):                                                 # H = 4, static unroll
        sl = slice(h * HD, (h + 1) * HD)
        scores = jnp.einsum('bqd,bkd->bqk', q[:, :, sl], k[:, :, sl],
                            preferred_element_type=jnp.float32)       # [B,S,S] f32
        p = _softmax(scores)
        ctx = jnp.einsum('bqk,bkd->bqd', p.astype(jnp.bfloat16), v[:, :, sl],
                         preferred_element_type=jnp.float32)          # [B,S,HD]
        ctxs.append(ctx)
    # single K=128 output projection instead of 4 accumulated K=32 matmuls
    ctx_full = jnp.concatenate(ctxs, axis=-1).reshape(N, D)           # [N, D] f32
    attn_out = jnp.dot(ctx_full.astype(jnp.bfloat16), wo,
                       preferred_element_type=jnp.float32) + bo

    # --- residual + LayerNorm 1 (f32) ---
    x1 = _layer_norm(x + attn_out, ln1_g, ln1_b)

    # --- feed-forward (ReLU), bf16 matmuls / f32 accumulation ---
    hid = jnp.dot(x1.astype(jnp.bfloat16), w1,
                  preferred_element_type=jnp.float32) + b1
    hid = jnp.maximum(hid, 0.0).astype(jnp.bfloat16)
    ffn = jnp.dot(hid, w2, preferred_element_type=jnp.float32) + b2

    # --- residual + LayerNorm 2 (f32) ---
    return _layer_norm(x1 + ffn, ln2_g, ln2_b)


# ---- fused encoder+decoder kernel: grid step 0 = encoder, step 1 = decoder ----
def seq2seq_kernel(x_ref, wcat_ref, w2_ref, vec_ref, o_ref, act_ref):
    step = pl.program_id(0)

    @pl.when(step == 0)
    def _():
        act_ref[...] = x_ref[...].reshape(N, D)                       # load input once

    h = _transformer_block(act_ref[...], wcat_ref[0], w2_ref[0], vec_ref[0])
    act_ref[...] = h                                                  # carry to next step
    o_ref[...] = h.reshape(B, S, D)                                   # final writeback at end


# ---- one-time parameter packing (runs OUTSIDE the jitted per-call path) ------
def pack_seq2seq_params(enc_params, dec_params):
    """Pack 2x16 raw tensors into 3 stacked slabs (called once at init)."""
    scale = 1.0 / (HD ** 0.5)

    def pack_one(p):
        wqkv = jnp.concatenate([p["wq"] * scale, p["wk"], p["wv"]], axis=1)   # [D, 3D]
        wcat = jnp.concatenate([wqkv, p["wo"], p["w1"]], axis=1).astype(jnp.bfloat16)  # [D, 768]
        w2 = p["w2"].astype(jnp.bfloat16)                                     # [F, D]
        row0 = jnp.concatenate([p["bq"] * scale, p["bk"], p["bv"]], axis=1)   # [1, 3D]
        row1 = jnp.concatenate([p["b1"], jnp.zeros((1, VECW - F), jnp.float32)], axis=1)
        row2 = jnp.concatenate([p["bo"], p["ln1_g"], p["ln1_b"]], axis=1)
        row3 = jnp.concatenate([p["b2"], p["ln2_g"], p["ln2_b"]], axis=1)
        vec = jnp.concatenate([row0, row1, row2, row3,
                               jnp.zeros((4, VECW), jnp.float32)], axis=0)    # [8, 3D]
        return wcat, w2, vec

    e, d = pack_one(enc_params), pack_one(dec_params)
    wcat = jnp.stack([e[0], d[0]], axis=0)     # [2, D, 768] bf16
    w2 = jnp.stack([e[1], d[1]], axis=0)       # [2, F, D]   bf16
    vec = jnp.stack([e[2], d[2]], axis=0)      # [2, 8, 384] f32
    return wcat, w2, vec


# ---- wrapper -----------------------------------------------------------------
@functools.partial(jax.jit, static_argnames=("train",))
def seq2seq_forward(x, packed, train=True):
    """Mirror of Seq2Seq.forward: decoder(encoder(x)) when train=True."""
    if not train:
        # TODO(synk): reference forward has no defined behaviour for train=False.
        return None
    wcat, w2, vec = packed
    return pl.pallas_call(
        seq2seq_kernel,
        out_shape=jax.ShapeDtypeStruct((B, S, D), jnp.float32),
        grid_spec=pltpu.PrefetchScalarGridSpec(
            num_scalar_prefetch=0,
            grid=(2,),                                   # step 0: encoder, step 1: decoder
            in_specs=[
                pl.BlockSpec((B, S, D), lambda i: (0, 0, 0)),       # x (DMA'd once)
                pl.BlockSpec((1, D, WCAT), lambda i: (i, 0, 0)),    # wqkv|wo|w1 slab per block
                pl.BlockSpec((1, F, D), lambda i: (i, 0, 0)),       # w2 per block
                pl.BlockSpec((1, 8, VECW), lambda i: (i, 0, 0)),    # bias/LN slab per block
            ],
            out_specs=pl.BlockSpec((B, S, D), lambda i: (0, 0, 0)),
            scratch_shapes=[pltpu.VMEM((N, D), jnp.float32)],       # activation carry
        ),
        compiler_params=pltpu.CompilerParams(
            dimension_semantics=("arbitrary",)),         # enc->dec is a sequential dependency
    )(x, wcat, w2, vec)


def init_block_params(key):
    ks = jax.random.split(key, 6)
    std = 0.02
    return {
        "wq": jax.random.normal(ks[0], (D, D), jnp.float32) * std,
        "bq": jnp.zeros((1, D), jnp.float32),
        "wk": jax.random.normal(ks[1], (D, D), jnp.float32) * std,
        "bk": jnp.zeros((1, D), jnp.float32),
        "wv": jax.random.normal(ks[2], (D, D), jnp.float32) * std,
        "bv": jnp.zeros((1, D), jnp.float32),
        "wo": jax.random.normal(ks[3], (D, D), jnp.float32) * std,
        "bo": jnp.zeros((1, D), jnp.float32),
        "ln1_g": jnp.ones((1, D), jnp.float32),
        "ln1_b": jnp.zeros((1, D), jnp.float32),
        "w1": jax.random.normal(ks[4], (D, F), jnp.float32) * std,
        "b1": jnp.zeros((1, F), jnp.float32),
        "w2": jax.random.normal(ks[5], (F, D), jnp.float32) * std,
        "b2": jnp.zeros((1, D), jnp.float32),
        "ln2_g": jnp.ones((1, D), jnp.float32),
        "ln2_b": jnp.zeros((1, D), jnp.float32),
    }


if __name__ == "__main__":
    root = jax.random.PRNGKey(0)
    kx, kenc, kdec = jax.random.split(root, 3)

    x = jax.random.normal(kx, (B, S, D), jnp.float32)
    enc_params = init_block_params(kenc)
    dec_params = init_block_params(kdec)

    # Pack once, outside the jitted per-call path (no per-step repack / recast).
    packed = jax.block_until_ready(pack_seq2seq_params(enc_params, dec_params))

    out = seq2seq_forward(x, packed, train=True)
    out = jax.block_until_ready(out)
    assert out.shape == (B, S, D) and out.dtype == jnp.float32
    assert bool(jnp.all(jnp.isfinite(out)))
    print("KERNEL_OK")
</pallas_src>

<mosaic_0001>
module attributes {stable_mosaic.version = 11 : i64} {
  func.func @seq2seq_kernel(%arg0: i32, %arg1: memref<2x8x128xf32, #tpu.memory_space<vmem>>, %arg2: memref<1x128x768xbf16, #tpu.memory_space<vmem>>, %arg3: memref<1x256x128xbf16, #tpu.memory_space<vmem>>, %arg4: memref<1x8x384xf32, #tpu.memory_space<vmem>>, %arg5: memref<2x8x128xf32, #tpu.memory_space<vmem>>, %arg6: memref<16x128xf32, #tpu.memory_space<vmem>>) attributes {dimension_semantics = [#tpu.dimension_semantics<arbitrary>], iteration_bounds = array<i64: 2>, scalar_prefetch = 0 : i64, scratch_operands = 1 : i64, tpu.core_type = #tpu.core_type<tc>, window_params = [{pipeline_mode = #tpu.pipeline_mode<synchronous>, transform_indices = @transform_0, window_bounds = array<i64: 2, 8, 128>}, {transform_indices = @transform_1, window_bounds = array<i64: 1, 128, 768>}, {transform_indices = @transform_2, window_bounds = array<i64: 1, 256, 128>}, {transform_indices = @transform_3, window_bounds = array<i64: 1, 8, 384>}, {pipeline_mode = #tpu.pipeline_mode<synchronous>, transform_indices = @transform_4, window_bounds = array<i64: 2, 8, 128>}]} {
    %c0_i32 = arith.constant 0 : i32
    %0 = arith.cmpi eq, %arg0, %c0_i32 : i32
    %1 = arith.extui %0 : i1 to i32
    %c0_i32_0 = arith.constant 0 : i32
    %2 = arith.cmpi ne, %1, %c0_i32_0 : i32
    scf.if %2 {
      %c0_46 = arith.constant 0 : index
      %c0_47 = arith.constant 0 : index
      %c0_48 = arith.constant 0 : index
      %163 = vector.load %arg1[%c0_46, %c0_47, %c0_48] : memref<2x8x128xf32, #tpu.memory_space<vmem>>, vector<2x8x128xf32>
      %164 = vector.shape_cast %163 : vector<2x8x128xf32> to vector<16x128xf32>
      %c0_49 = arith.constant 0 : index
      %c0_50 = arith.constant 0 : index
      %165 = vector.load %arg6[%c0_49, %c0_50] : memref<16x128xf32, #tpu.memory_space<vmem>>, vector<16x128xf32>
      tpu.vector_store %arg6[%c0_49, %c0_50], %164 {strides = array<i32>} : memref<16x128xf32, #tpu.memory_space<vmem>>, vector<16x128xf32>,
    } else {
    }
    %c0 = arith.constant 0 : index
    %c0_1 = arith.constant 0 : index
    %3 = vector.load %arg6[%c0, %c0_1] : memref<16x128xf32, #tpu.memory_space<vmem>>, vector<16x128xf32>
    %c0_2 = arith.constant 0 : index
    %c0_3 = arith.constant 0 : index
    %c0_4 = arith.constant 0 : index
    %4 = vector.load %arg2[%c0_2, %c0_3, %c0_4] : memref<1x128x768xbf16, #tpu.memory_space<vmem>>, vector<1x128x768xbf16>
    %5 = vector.shape_cast %4 : vector<1x128x768xbf16> to vector<128x768xbf16>
    %c0_5 = arith.constant 0 : index
    %c0_6 = arith.constant 0 : index
    %c0_7 = arith.constant 0 : index
    %6 = vector.load %arg3[%c0_5, %c0_6, %c0_7] : memref<1x256x128xbf16, #tpu.memory_space<vmem>>, vector<1x256x128xbf16>
    %7 = vector.shape_cast %6 : vector<1x256x128xbf16> to vector<256x128xbf16>
    %c0_8 = arith.constant 0 : index
    %c0_9 = arith.constant 0 : index
    %c0_10 = arith.constant 0 : index
    %8 = vector.load %arg4[%c0_8, %c0_9, %c0_10] : memref<1x8x384xf32, #tpu.memory_space<vmem>>, vector<1x8x384xf32>
    %9 = vector.shape_cast %8 : vector<1x8x384xf32> to vector<8x384xf32>
    %10 = vector.extract_strided_slice %5 {offsets = [0, 0], sizes = [128, 384], strides = [1, 1]} : vector<128x768xbf16> to vector<128x384xbf16>
    %11 = vector.extract_strided_slice %5 {offsets = [0, 384], sizes = [128, 128], strides = [1, 1]} : vector<128x768xbf16> to vector<128x128xbf16>
    %12 = vector.extract_strided_slice %5 {offsets = [0, 512], sizes = [128, 256], strides = [1, 1]} : vector<128x768xbf16> to vector<128x256xbf16>
    %13 = vector.extract_strided_slice %9 {offsets = [0, 0], sizes = [1, 384], strides = [1, 1]} : vector<8x384xf32> to vector<1x384xf32>
    %14 = vector.extract_strided_slice %9 {offsets = [1, 0], sizes = [1, 256], strides = [1, 1]} : vector<8x384xf32> to vector<1x256xf32>
    %15 = vector.extract_strided_slice %9 {offsets = [2, 0], sizes = [1, 128], strides = [1, 1]} : vector<8x384xf32> to vector<1x128xf32>
    %16 = vector.extract_strided_slice %9 {offsets = [2, 128], sizes = [1, 128], strides = [1, 1]} : vector<8x384xf32> to vector<1x128xf32>
    %17 = vector.extract_strided_slice %9 {offsets = [2, 256], sizes = [1, 128], strides = [1, 1]} : vector<8x384xf32> to vector<1x128xf32>
    %18 = vector.extract_strided_slice %9 {offsets = [3, 0], sizes = [1, 128], strides = [1, 1]} : vector<8x384xf32> to vector<1x128xf32>
    %19 = vector.extract_strided_slice %9 {offsets = [3, 128], sizes = [1, 128], strides = [1, 1]} : vector<8x384xf32> to vector<1x128xf32>
    %20 = vector.extract_strided_slice %9 {offsets = [3, 256], sizes = [1, 128], strides = [1, 1]} : vector<8x384xf32> to vector<1x128xf32>
    %21 = arith.truncf %3 : vector<16x128xf32> to vector<16x128xbf16>
    %cst = arith.constant dense<0.000000e+00> : vector<16x384xf32>
    %22 = tpu.matmul %21, %10, %cst {dimension_numbers = #tpu.dot_dimension_numbers<[1], [0], [0], [1], [0, 0, 1, 1], [], []>} : vector<16x128xbf16>, vector<128x384xbf16>, vector<16x384xf32> -> vector<16x384xf32>
    %23 = vector.broadcast %13 : vector<1x384xf32> to vector<16x384xf32>
    %24 = arith.addf %22, %23 : vector<16x384xf32>
    %25 = vector.extract_strided_slice %24 {offsets = [0, 0], sizes = [16, 128], strides = [1, 1]} : vector<16x384xf32> to vector<16x128xf32>
    %26 = arith.truncf %25 : vector<16x128xf32> to vector<16x128xbf16>
    %27 = vector.shape_cast %26 : vector<16x128xbf16> to vector<2x8x128xbf16>
    %28 = vector.extract_strided_slice %24 {offsets = [0, 128], sizes = [16, 128], strides = [1, 1]} : vector<16x384xf32> to vector<16x128xf32>
    %29 = arith.truncf %28 : vector<16x128xf32> to vector<16x128xbf16>
    %30 = vector.shape_cast %29 : vector<16x128xbf16> to vector<2x8x128xbf16>
    %31 = vector.extract_strided_slice %24 {offsets = [0, 256], sizes = [16, 128], strides = [1, 1]} : vector<16x384xf32> to vector<16x128xf32>
    %32 = arith.truncf %31 : vector<16x128xf32> to vector<16x128xbf16>
    %33 = vector.shape_cast %32 : vector<16x128xbf16> to vector<2x8x128xbf16>
    %34 = vector.extract_strided_slice %27 {offsets = [0, 0, 0], sizes = [2, 8, 32], strides = [1, 1, 1]} : vector<2x8x128xbf16> to vector<2x8x32xbf16>
    %35 = vector.extract_strided_slice %30 {offsets = [0, 0, 0], sizes = [2, 8, 32], strides = [1, 1, 1]} : vector<2x8x128xbf16> to vector<2x8x32xbf16>
    "tpu.trace_start"() <{level = 10 : i32, message = "bqd,bkd->bqk"}> : () -> ()
    %cst_11 = arith.constant dense<0.000000e+00> : vector<2x8x8xf32>
    %36 = tpu.matmul %34, %35, %cst_11 {dimension_numbers = #tpu.dot_dimension_numbers<[2], [2], [1], [1], [0, 0, 0, 1, 1, 1], [0], [0]>} : vector<2x8x32xbf16>, vector<2x8x32xbf16>, vector<2x8x8xf32> -> vector<2x8x8xf32>
    "tpu.trace_stop"() : () -> ()
    %cst_12 = arith.constant dense<0xFF800000> : vector<2x8xf32>
    %37 = vector.multi_reduction <maximumf>, %36, %cst_12 [2] : vector<2x8x8xf32> to vector<2x8xf32>
    %38 = vector.shape_cast %37 : vector<2x8xf32> to vector<2x8x1xf32>
    %39 = vector.broadcast %38 : vector<2x8x1xf32> to vector<2x8x8xf32>
    %40 = arith.subf %36, %39 : vector<2x8x8xf32>
    %41 = math.exp %40 : vector<2x8x8xf32>
    %cst_13 = arith.constant dense<0.000000e+00> : vector<2x8xf32>
    %42 = vector.multi_reduction <add>, %41, %cst_13 [2] : vector<2x8x8xf32> to vector<2x8xf32>
    %43 = vector.shape_cast %42 : vector<2x8xf32> to vector<2x8x1xf32>
    %44 = tpu.reciprocal %43 {approx = true} : vector<2x8x1xf32> -> vector<2x8x1xf32>
    %45 = vector.broadcast %44 : vector<2x8x1xf32> to vector<2x8x8xf32>
    %46 = arith.mulf %41, %45 : vector<2x8x8xf32>
    %47 = arith.truncf %46 : vector<2x8x8xf32> to vector<2x8x8xbf16>
    %48 = vector.extract_strided_slice %33 {offsets = [0, 0, 0], sizes = [2, 8, 32], strides = [1, 1, 1]} : vector<2x8x128xbf16> to vector<2x8x32xbf16>
    "tpu.trace_start"() <{level = 10 : i32, message = "bqk,bkd->bqd"}> : () -> ()
    %cst_14 = arith.constant dense<0.000000e+00> : vector<2x8x32xf32>
    %49 = tpu.matmul %47, %48, %cst_14 {dimension_numbers = #tpu.dot_dimension_numbers<[2], [1], [1], [2], [0, 0, 0, 1, 1, 2], [0], [0]>} : vector<2x8x8xbf16>, vector<2x8x32xbf16>, vector<2x8x32xf32> -> vector<2x8x32xf32>
    "tpu.trace_stop"() : () -> ()
    %50 = vector.extract_strided_slice %27 {offsets = [0, 0, 32], sizes = [2, 8, 32], strides = [1, 1, 1]} : vector<2x8x128xbf16> to vector<2x8x32xbf16>
    %51 = vector.extract_strided_slice %30 {offsets = [0, 0, 32], sizes = [2, 8, 32], strides = [1, 1, 1]} : vector<2x8x128xbf16> to vector<2x8x32xbf16>
    "tpu.trace_start"() <{level = 10 : i32, message = "bqd,bkd->bqk"}> : () -> ()
    %cst_15 = arith.constant dense<0.000000e+00> : vector<2x8x8xf32>
    %52 = tpu.matmul %50, %51, %cst_15 {dimension_numbers = #tpu.dot_dimension_numbers<[2], [2], [1], [1], [0, 0, 0, 1, 1, 1], [0], [0]>} : vector<2x8x32xbf16>, vector<2x8x32xbf16>, vector<2x8x8xf32> -> vector<2x8x8xf32>
    "tpu.trace_stop"() : () -> ()
    %cst_16 = arith.constant dense<0xFF800000> : vector<2x8xf32>
    %53 = vector.multi_reduction <maximumf>, %52, %cst_16 [2] : vector<2x8x8xf32> to vector<2x8xf32>
    %54 = vector.shape_cast %53 : vector<2x8xf32> to vector<2x8x1xf32>
    %55 = vector.broadcast %54 : vector<2x8x1xf32> to vector<2x8x8xf32>
    %56 = arith.subf %52, %55 : vector<2x8x8xf32>
    %57 = math.exp %56 : vector<2x8x8xf32>
    %cst_17 = arith.constant dense<0.000000e+00> : vector<2x8xf32>
    %58 = vector.multi_reduction <add>, %57, %cst_17 [2] : vector<2x8x8xf32> to vector<2x8xf32>
    %59 = vector.shape_cast %58 : vector<2x8xf32> to vector<2x8x1xf32>
    %60 = tpu.reciprocal %59 {approx = true} : vector<2x8x1xf32> -> vector<2x8x1xf32>
    %61 = vector.broadcast %60 : vector<2x8x1xf32> to vector<2x8x8xf32>
    %62 = arith.mulf %57, %61 : vector<2x8x8xf32>
    %63 = arith.truncf %62 : vector<2x8x8xf32> to vector<2x8x8xbf16>
    %64 = vector.extract_strided_slice %33 {offsets = [0, 0, 32], sizes = [2, 8, 32], strides = [1, 1, 1]} : vector<2x8x128xbf16> to vector<2x8x32xbf16>
    "tpu.trace_start"() <{level = 10 : i32, message = "bqk,bkd->bqd"}> : () -> ()
    %cst_18 = arith.constant dense<0.000000e+00> : vector<2x8x32xf32>
    %65 = tpu.matmul %63, %64, %cst_18 {dimension_numbers = #tpu.dot_dimension_numbers<[2], [1], [1], [2], [0, 0, 0, 1, 1, 2], [0], [0]>} : vector<2x8x8xbf16>, vector<2x8x32xbf16>, vector<2x8x32xf32> -> vector<2x8x32xf32>
    "tpu.trace_stop"() : () -> ()
    %66 = vector.extract_strided_slice %27 {offsets = [0, 0, 64], sizes = [2, 8, 32], strides = [1, 1, 1]} : vector<2x8x128xbf16> to vector<2x8x32xbf16>
    %67 = vector.extract_strided_slice %30 {offsets = [0, 0, 64], sizes = [2, 8, 32], strides = [1, 1, 1]} : vector<2x8x128xbf16> to vector<2x8x32xbf16>
    "tpu.trace_start"() <{level = 10 : i32, message = "bqd,bkd->bqk"}> : () -> ()
    %cst_19 = arith.constant dense<0.000000e+00> : vector<2x8x8xf32>
    %68 = tpu.matmul %66, %67, %cst_19 {dimension_numbers = #tpu.dot_dimension_numbers<[2], [2], [1], [1], [0, 0, 0, 1, 1, 1], [0], [0]>} : vector<2x8x32xbf16>, vector<2x8x32xbf16>, vector<2x8x8xf32> -> vector<2x8x8xf32>
    "tpu.trace_stop"() : () -> ()
    %cst_20 = arith.constant dense<0xFF800000> : vector<2x8xf32>
    %69 = vector.multi_reduction <maximumf>, %68, %cst_20 [2] : vector<2x8x8xf32> to vector<2x8xf32>
    %70 = vector.shape_cast %69 : vector<2x8xf32> to vector<2x8x1xf32>
    %71 = vector.broadcast %70 : vector<2x8x1xf32> to vector<2x8x8xf32>
    %72 = arith.subf %68, %71 : vector<2x8x8xf32>
    %73 = math.exp %72 : vector<2x8x8xf32>
    %cst_21 = arith.constant dense<0.000000e+00> : vector<2x8xf32>
    %74 = vector.multi_reduction <add>, %73, %cst_21 [2] : vector<2x8x8xf32> to vector<2x8xf32>
    %75 = vector.shape_cast %74 : vector<2x8xf32> to vector<2x8x1xf32>
    %76 = tpu.reciprocal %75 {approx = true} : vector<2x8x1xf32> -> vector<2x8x1xf32>
    %77 = vector.broadcast %76 : vector<2x8x1xf32> to vector<2x8x8xf32>
    %78 = arith.mulf %73, %77 : vector<2x8x8xf32>
    %79 = arith.truncf %78 : vector<2x8x8xf32> to vector<2x8x8xbf16>
    %80 = vector.extract_strided_slice %33 {offsets = [0, 0, 64], sizes = [2, 8, 32], strides = [1, 1, 1]} : vector<2x8x128xbf16> to vector<2x8x32xbf16>
    "tpu.trace_start"() <{level = 10 : i32, message = "bqk,bkd->bqd"}> : () -> ()
    %cst_22 = arith.constant dense<0.000000e+00> : vector<2x8x32xf32>
    %81 = tpu.matmul %79, %80, %cst_22 {dimension_numbers = #tpu.dot_dimension_numbers<[2], [1], [1], [2], [0, 0, 0, 1, 1, 2], [0], [0]>} : vector<2x8x8xbf16>, vector<2x8x32xbf16>, vector<2x8x32xf32> -> vector<2x8x32xf32>
    "tpu.trace_stop"() : () -> ()
    %82 = vector.extract_strided_slice %27 {offsets = [0, 0, 96], sizes = [2, 8, 32], strides = [1, 1, 1]} : vector<2x8x128xbf16> to vector<2x8x32xbf16>
    %83 = vector.extract_strided_slice %30 {offsets = [0, 0, 96], sizes = [2, 8, 32], strides = [1, 1, 1]} : vector<2x8x128xbf16> to vector<2x8x32xbf16>
    "tpu.trace_start"() <{level = 10 : i32, message = "bqd,bkd->bqk"}> : () -> ()
    %cst_23 = arith.constant dense<0.000000e+00> : vector<2x8x8xf32>
    %84 = tpu.matmul %82, %83, %cst_23 {dimension_numbers = #tpu.dot_dimension_numbers<[2], [2], [1], [1], [0, 0, 0, 1, 1, 1], [0], [0]>} : vector<2x8x32xbf16>, vector<2x8x32xbf16>, vector<2x8x8xf32> -> vector<2x8x8xf32>
    "tpu.trace_stop"() : () -> ()
    %cst_24 = arith.constant dense<0xFF800000> : vector<2x8xf32>
    %85 = vector.multi_reduction <maximumf>, %84, %cst_24 [2] : vector<2x8x8xf32> to vector<2x8xf32>
    %86 = vector.shape_cast %85 : vector<2x8xf32> to vector<2x8x1xf32>
    %87 = vector.broadcast %86 : vector<2x8x1xf32> to vector<2x8x8xf32>
    %88 = arith.subf %84, %87 : vector<2x8x8xf32>
    %89 = math.exp %88 : vector<2x8x8xf32>
    %cst_25 = arith.constant dense<0.000000e+00> : vector<2x8xf32>
    %90 = vector.multi_reduction <add>, %89, %cst_25 [2] : vector<2x8x8xf32> to vector<2x8xf32>
    %91 = vector.shape_cast %90 : vector<2x8xf32> to vector<2x8x1xf32>
    %92 = tpu.reciprocal %91 {approx = true} : vector<2x8x1xf32> -> vector<2x8x1xf32>
    %93 = vector.broadcast %92 : vector<2x8x1xf32> to vector<2x8x8xf32>
    %94 = arith.mulf %89, %93 : vector<2x8x8xf32>
    %95 = arith.truncf %94 : vector<2x8x8xf32> to vector<2x8x8xbf16>
    %96 = vector.extract_strided_slice %33 {offsets = [0, 0, 96], sizes = [2, 8, 32], strides = [1, 1, 1]} : vector<2x8x128xbf16> to vector<2x8x32xbf16>
    "tpu.trace_start"() <{level = 10 : i32, message = "bqk,bkd->bqd"}> : () -> ()
    %cst_26 = arith.constant dense<0.000000e+00> : vector<2x8x32xf32>
    %97 = tpu.matmul %95, %96, %cst_26 {dimension_numbers = #tpu.dot_dimension_numbers<[2], [1], [1], [2], [0, 0, 0, 1, 1, 2], [0], [0]>} : vector<2x8x8xbf16>, vector<2x8x32xbf16>, vector<2x8x32xf32> -> vector<2x8x32xf32>
    "tpu.trace_stop"() : () -> ()
    %98 = tpu.concatenate %49, %65, %81, %97 in 2 : vector<2x8x32xf32>, vector<2x8x32xf32>, vector<2x8x32xf32>, vector<2x8x32xf32> -> vector<2x8x128xf32>
    %99 = vector.shape_cast %98 : vector<2x8x128xf32> to vector<16x128xf32>
    %100 = arith.truncf %99 : vector<16x128xf32> to vector<16x128xbf16>
    %cst_27 = arith.constant dense<0.000000e+00> : vector<16x128xf32>
    %101 = tpu.matmul %100, %11, %cst_27 {dimension_numbers = #tpu.dot_dimension_numbers<[1], [0], [0], [1], [0, 0, 1, 1], [], []>} : vector<16x128xbf16>, vector<128x128xbf16>, vector<16x128xf32> -> vector<16x128xf32>
    %102 = vector.broadcast %15 : vector<1x128xf32> to vector<16x128xf32>
    %103 = arith.addf %101, %102 : vector<16x128xf32>
    %104 = arith.addf %3, %103 : vector<16x128xf32>
    %cst_28 = arith.constant dense<0.000000e+00> : vector<16xf32>
    %105 = vector.multi_reduction <add>, %104, %cst_28 [1] : vector<16x128xf32> to vector<16xf32>
    %106 = vector.shape_cast %105 : vector<16xf32> to vector<16x1xf32>
    %cst_29 = arith.constant 1.280000e+02 : f32
    %107 = vector.broadcast %cst_29 : f32 to vector<16x1xf32>
    %108 = arith.divf %106, %107 : vector<16x1xf32>
    %109 = vector.broadcast %108 : vector<16x1xf32> to vector<16x128xf32>
    %110 = arith.subf %104, %109 : vector<16x128xf32>
    %111 = arith.mulf %110, %110 : vector<16x128xf32>
    %cst_30 = arith.constant dense<0.000000e+00> : vector<16xf32>
    %112 = vector.multi_reduction <add>, %111, %cst_30 [1] : vector<16x128xf32> to vector<16xf32>
    %113 = vector.shape_cast %112 : vector<16xf32> to vector<16x1xf32>
    %cst_31 = arith.constant 1.280000e+02 : f32
    %114 = vector.broadcast %cst_31 : f32 to vector<16x1xf32>
    %115 = arith.divf %113, %114 : vector<16x1xf32>
    %116 = vector.broadcast %108 : vector<16x1xf32> to vector<16x128xf32>
    %117 = arith.subf %104, %116 : vector<16x128xf32>
    %cst_32 = arith.constant 9.99999974E-6 : f32
    %118 = vector.broadcast %cst_32 : f32 to vector<16x1xf32>
    %119 = arith.addf %115, %118 : vector<16x1xf32>
    %120 = math.rsqrt %119 : vector<16x1xf32>
    %121 = vector.broadcast %120 : vector<16x1xf32> to vector<16x128xf32>
    %122 = arith.mulf %117, %121 : vector<16x128xf32>
    %123 = vector.broadcast %16 : vector<1x128xf32> to vector<16x128xf32>
    %124 = arith.mulf %122, %123 : vector<16x128xf32>
    %125 = vector.broadcast %17 : vector<1x128xf32> to vector<16x128xf32>
    %126 = arith.addf %124, %125 : vector<16x128xf32>
    %127 = arith.truncf %126 : vector<16x128xf32> to vector<16x128xbf16>
    %cst_33 = arith.constant dense<0.000000e+00> : vector<16x256xf32>
    %128 = tpu.matmul %127, %12, %cst_33 {dimension_numbers = #tpu.dot_dimension_numbers<[1], [0], [0], [1], [0, 0, 1, 1], [], []>} : vector<16x128xbf16>, vector<128x256xbf16>, vector<16x256xf32> -> vector<16x256xf32>
    %129 = vector.broadcast %14 : vector<1x256xf32> to vector<16x256xf32>
    %130 = arith.addf %128, %129 : vector<16x256xf32>
    %cst_34 = arith.constant 0.000000e+00 : f32
    %131 = vector.broadcast %cst_34 : f32 to vector<16x256xf32>
    %132 = arith.maximumf %130, %131 : vector<16x256xf32>
    %133 = arith.truncf %132 : vector<16x256xf32> to vector<16x256xbf16>
    %cst_35 = arith.constant dense<0.000000e+00> : vector<16x128xf32>
    %134 = tpu.matmul %133, %7, %cst_35 {dimension_numbers = #tpu.dot_dimension_numbers<[1], [0], [0], [1], [0, 0, 1, 1], [], []>} : vector<16x256xbf16>, vector<256x128xbf16>, vector<16x128xf32> -> vector<16x128xf32>
    %135 = vector.broadcast %18 : vector<1x128xf32> to vector<16x128xf32>
    %136 = arith.addf %134, %135 : vector<16x128xf32>
    %137 = arith.addf %126, %136 : vector<16x128xf32>
    %cst_36 = arith.constant dense<0.000000e+00> : vector<16xf32>
    %138 = vector.multi_reduction <add>, %137, %cst_36 [1] : vector<16x128xf32> to vector<16xf32>
    %139 = vector.shape_cast %138 : vector<16xf32> to vector<16x1xf32>
    %cst_37 = arith.constant 1.280000e+02 : f32
    %140 = vector.broadcast %cst_37 : f32 to vector<16x1xf32>
    %141 = arith.divf %139, %140 : vector<16x1xf32>
    %142 = vector.broadcast %141 : vector<16x1xf32> to vector<16x128xf32>
    %143 = arith.subf %137, %142 : vector<16x128xf32>
    %144 = arith.mulf %143, %143 : vector<16x128xf32>
    %cst_38 = arith.constant dense<0.000000e+00> : vector<16xf32>
    %145 = vector.multi_reduction <add>, %144, %cst_38 [1] : vector<16x128xf32> to vector<16xf32>
    %146 = vector.shape_cast %145 : vector<16xf32> to vector<16x1xf32>
    %cst_39 = arith.constant 1.280000e+02 : f32
    %147 = vector.broadcast %cst_39 : f32 to vector<16x1xf32>
    %148 = arith.divf %146, %147 : vector<16x1xf32>
    %149 = vector.broadcast %141 : vector<16x1xf32> to vector<16x128xf32>
    %150 = arith.subf %137, %149 : vector<16x128xf32>
    %cst_40 = arith.constant 9.99999974E-6 : f32
    %151 = vector.broadcast %cst_40 : f32 to vector<16x1xf32>
    %152 = arith.addf %148, %151 : vector<16x1xf32>
    %153 = math.rsqrt %152 : vector<16x1xf32>
    %154 = vector.broadcast %153 : vector<16x1xf32> to vector<16x128xf32>
    %155 = arith.mulf %150, %154 : vector<16x128xf32>
    %156 = vector.broadcast %19 : vector<1x128xf32> to vector<16x128xf32>
    %157 = arith.mulf %155, %156 : vector<16x128xf32>
    %158 = vector.broadcast %20 : vector<1x128xf32> to vector<16x128xf32>
    %159 = arith.addf %157, %158 : vector<16x128xf32>
    %c0_41 = arith.constant 0 : index
    %c0_42 = arith.constant 0 : index
    %160 = vector.load %arg6[%c0_41, %c0_42] : memref<16x128xf32, #tpu.memory_space<vmem>>, vector<16x128xf32>
    tpu.vector_store %arg6[%c0_41, %c0_42], %159 {strides = array<i32>} : memref<16x128xf32, #tpu.memory_space<vmem>>, vector<16x128xf32>,
    %161 = vector.shape_cast %159 : vector<16x128xf32> to vector<2x8x128xf32>
    %c0_43 = arith.constant 0 : index
    %c0_44 = arith.constant 0 : index
    %c0_45 = arith.constant 0 : index
    %162 = vector.load %arg5[%c0_43, %c0_44, %c0_45] : memref<2x8x128xf32, #tpu.memory_space<vmem>>, vector<2x8x128xf32>
    tpu.vector_store %arg5[%c0_43, %c0_44, %c0_45], %161 {strides = array<i32>} : memref<2x8x128xf32, #tpu.memory_space<vmem>>, vector<2x8x128xf32>,
    return
  }
  func.func @transform_0(%arg0: i32) -> (i32, i32, i32) {
    %c0_i32 = arith.constant 0 : i32
    %c0_i32_0 = arith.constant 0 : i32
    %c0_i32_1 = arith.constant 0 : i32
    %c0_i32_2 = arith.constant 0 : i32
    return %c0_i32, %c0_i32_0, %c0_i32_1 : i32, i32, i32
  }
  func.func @transform_1(%arg0: i32) -> (i32, i32, i32) {
    %c0_i32 = arith.constant 0 : i32
    %c0_i32_0 = arith.constant 0 : i32
    %c0_i32_1 = arith.constant 0 : i32
    return %arg0, %c0_i32, %c0_i32_0 : i32, i32, i32
  }
  func.func @transform_2(%arg0: i32) -> (i32, i32, i32) {
    %c0_i32 = arith.constant 0 : i32
    %c0_i32_0 = arith.constant 0 : i32
    %c0_i32_1 = arith.constant 0 : i32
    return %arg0, %c0_i32, %c0_i32_0 : i32, i32, i32
  }
  func.func @transform_3(%arg0: i32) -> (i32, i32, i32) {
    %c0_i32 = arith.constant 0 : i32
    %c0_i32_0 = arith.constant 0 : i32
    %c0_i32_1 = arith.constant 0 : i32
    return %arg0, %c0_i32, %c0_i32_0 : i32, i32, i32
  }
  func.func @transform_4(%arg0: i32) -> (i32, i32, i32) {
    %c0_i32 = arith.constant 0 : i32
    %c0_i32_0 = arith.constant 0 : i32
    %c0_i32_1 = arith.constant 0 : i32
    %c0_i32_2 = arith.constant 0 : i32
    return %c0_i32, %c0_i32_0, %c0_i32_1 : i32, i32, i32
  }
}

</mosaic_0001>

<llo_original>
// kernel: seq2seq_forward.1
$region0: #{seq2seq_forward.1}
  #allocation0 [shape = 'u32[]', space=smem, size = 0x4, offset = 0x4, fixed_abs, tag = 'smem constant byte address 0x4 - core index']
  #allocation1 [shape = 'u32[144,128]{1,0:T(1,128)}', space=vmem, size = 0x12000, scoped, tag = 'internal scratch']
  #allocation2 [shape = 'f32[16,128]{1,0:T(8,128)}', space=vmem, size = 0x2000, scoped, tag = 'scratch operand']
  %s0 = inlined_call_operand.hbm [shape: f32[2,8,128], index: 0, kind: input, shape index: {}]
  %s1 = inlined_call_operand.hbm [shape: bf16[2,128,768], index: 1, kind: input, shape index: {}]
  %s2 = inlined_call_operand.hbm [shape: bf16[2,256,128], index: 2, kind: input, shape index: {}]
  %s3 = inlined_call_operand.hbm [shape: f32[2,8,384], index: 3, kind: input, shape index: {}]
  %s4 = inlined_call_operand.hbm [shape: f32[2,8,128], index: 4, kind: output, shape index: {}]
  %s5 = sld [smem:[#allocation0]]
  $region69: #{seq2seq_forward.1} parent=0
    _
  %s7 = ssub.s32 1, %s5
  %s8 = scalar_select 0, %s7, %s5
  $region1: #{seq2seq_forward.1} parent=0
    #allocation3 [shape = 'u8[8192]{0}', space=vmem, size = 0x2000, scoped, tag = 'input window, operand 0, single buffered']
    #allocation4 [shape = 's32[2]{0}', space=sflag, size = 0x8, scoped, tag = 'scoped memory for seq2seq_forward.1']
    #allocation5 [shape = 's32[2]{0}', space=sflag, size = 0x8, scoped, tag = 'scoped memory for seq2seq_forward.1']
    #allocation6 [shape = 'u8[393216]{0}', space=vmem, size = 0x60000, scoped, tag = 'input window, operand 1']
    #allocation7 [shape = 's32[2]{0}', space=sflag, size = 0x8, scoped, tag = 'scoped memory for seq2seq_forward.1']
    #allocation8 [shape = 'u8[131072]{0}', space=vmem, size = 0x20000, scoped, tag = 'input window, operand 2']
    #allocation9 [shape = 'u8[24576]{0}', space=vmem, size = 0x6000, scoped, tag = 'input window, operand 3']
    #allocation10 [shape = 's32[2]{0}', space=sflag, size = 0x8, scoped, tag = 'scoped memory for seq2seq_forward.1']
    #allocation11 [shape = 'u8[8192]{0}', space=vmem, size = 0x2000, scoped, tag = 'output window, operand 0, single buffered']
    %9 = vsyncpa [#allocation4], 0
    %10 = vsyncpa [#allocation7], 0
    %s11 = scalar_lea.sflag [#allocation7], 1
    %12 = vsyncpa %s11, 0
    %13 = vsyncpa [#allocation10], 0
    %s14 = scalar_lea.sflag [#allocation10], 1
    %15 = vsyncpa %s14, 0
    %16 = vsyncpa [#allocation5], 0
    loop: start=0, step=1, limit=4
    $region2: #{seq2seq_forward.1} parent=1 // loop_pre_header
      _
    $region3: #{seq2seq_forward.1} parent=1 // loop_header
      %s18 = sphi 0, %s22
      %p19 = scmp.ge.s32.totalorder %s18, 4
      %s26 = sphi 0, %s26
      %s28 = sphi 0, %s26
      %s29 = sphi 0, %s28
      %s43 = sphi 0, %s29
      %s49 = sphi 0, %s51
      %s52 = sphi 0, %s49
      %s53 = sphi 0, %s52
      %s69 = sphi 0, %s53
      %s75 = sphi 0, %s77
      %s78 = sphi 0, %s75
      %s79 = sphi 0, %s78
      %s95 = sphi 0, %s79
      %s101 = sphi 0, %s103
      %s104 = sphi 0, %s101
      %s105 = sphi 0, %s104
      %s121 = sphi 0, %s105
      %s125 = sphi 0, %s125
      %s127 = sphi 0, %s125
      %s128 = sphi 0, %s127
      %s142 = sphi 0, %s128
    $region4: #{seq2seq_forward.1} parent=1 // loop_header_branch
      %21 = sbr.rel (%p19) target = $region8
    $region5: #{seq2seq_forward.1} parent=1 // loop_body
      %s23 = ssub.s32 %s18, 1
      %s24 = ssub.s32 %s18, 2
      %s25 = sadd.s32 %s18, 1
      %s27 = sadd.s32 %s26, 1
      %p30 = scmp.eq.s32.totalorder %s18, 1
      %p31 = scmp.ne.s32.totalorder %s26, %s28
      %p32 = scmp.eq.s32.totalorder %s18, 0
      %p33 = por %p31, %p32
      %p34 = scmp.ne.s32.totalorder %s26, %s28
      %p35 = scmp.eq.s32.totalorder %s23, 1
      %p36 = por %p34, %p35
      %p37 = scmp.ne.s32.totalorder %s28, %s29
      %p38 = scmp.eq.s32.totalorder %s23, 0
      %p39 = por %p37, %p38
      %p40 = scmp.ne.s32.totalorder %s28, %s29
      %p41 = scmp.eq.s32.totalorder %s24, 1
      %p42 = por %p40, %p41
      %p44 = scmp.ne.s32.totalorder %s29, %s43
      %p45 = scmp.eq.s32.totalorder %s24, 0
      %p46 = por %p44, %p45
      %s47 = ssub.s32 %s18, %s25
      %p48 = scmp.eq.s32.totalorder %s47, 0
      %s50 = sadd.s32 %s49, 1
      %s51 = scalar_select %p48, %s49, %s50
      %p54 = pneg %p48
      %p55 = scmp.eq.s32.totalorder %s18, 1
      %p56 = por %p54, %p55
      %p57 = scmp.ne.s32.totalorder %s49, %s52
      %p58 = scmp.eq.s32.totalorder %s18, 0
      %p59 = por %p57, %p58
      %p60 = scmp.ne.s32.totalorder %s49, %s52
      %p61 = scmp.eq.s32.totalorder %s23, 1
      %p62 = por %p60, %p61
      %p63 = scmp.ne.s32.totalorder %s52, %s53
      %p64 = scmp.eq.s32.totalorder %s23, 0
      %p65 = por %p63, %p64
      %p66 = scmp.ne.s32.totalorder %s52, %s53
      %p67 = scmp.eq.s32.totalorder %s24, 1
      %p68 = por %p66, %p67
      %p70 = scmp.ne.s32.totalorder %s53, %s69
      %p71 = scmp.eq.s32.totalorder %s24, 0
      %p72 = por %p70, %p71
      %s73 = ssub.s32 %s18, %s25
      %p74 = scmp.eq.s32.totalorder %s73, 0
      %s76 = sadd.s32 %s75, 1
      %s77 = scalar_select %p74, %s75, %s76
      %p80 = pneg %p74
      %p81 = scmp.eq.s32.totalorder %s18, 1
      %p82 = por %p80, %p81
      %p83 = scmp.ne.s32.totalorder %s75, %s78
      %p84 = scmp.eq.s32.totalorder %s18, 0
      %p85 = por %p83, %p84
      %p86 = scmp.ne.s32.totalorder %s75, %s78
      %p87 = scmp.eq.s32.totalorder %s23, 1
      %p88 = por %p86, %p87
      %p89 = scmp.ne.s32.totalorder %s78, %s79
      %p90 = scmp.eq.s32.totalorder %s23, 0
      %p91 = por %p89, %p90
      %p92 = scmp.ne.s32.totalorder %s78, %s79
      %p93 = scmp.eq.s32.totalorder %s24, 1
      %p94 = por %p92, %p93
      %p96 = scmp.ne.s32.totalorder %s79, %s95
      %p97 = scmp.eq.s32.totalorder %s24, 0
      %p98 = por %p96, %p97
      %s99 = ssub.s32 %s18, %s25
      %p100 = scmp.eq.s32.totalorder %s99, 0
      %s102 = sadd.s32 %s101, 1
      %s103 = scalar_select %p100, %s101, %s102
      %p106 = pneg %p100
      %p107 = scmp.eq.s32.totalorder %s18, 1
      %p108 = por %p106, %p107
      %p109 = scmp.ne.s32.totalorder %s101, %s104
      %p110 = scmp.eq.s32.totalorder %s18, 0
      %p111 = por %p109, %p110
      %p112 = scmp.ne.s32.totalorder %s101, %s104
      %p113 = scmp.eq.s32.totalorder %s23, 1
      %p114 = por %p112, %p113
      %p115 = scmp.ne.s32.totalorder %s104, %s105
      %p116 = scmp.eq.s32.totalorder %s23, 0
      %p117 = por %p115, %p116
      %p118 = scmp.ne.s32.totalorder %s104, %s105
      %p119 = scmp.eq.s32.totalorder %s24, 1
      %p120 = por %p118, %p119
      %p122 = scmp.ne.s32.totalorder %s105, %s121
      %p123 = scmp.eq.s32.totalorder %s24, 0
      %p124 = por %p122, %p123
      %s126 = sadd.s32 %s125, 1
      %p129 = scmp.eq.s32.totalorder %s18, 1
      %p130 = scmp.ne.s32.totalorder %s125, %s127
      %p131 = scmp.eq.s32.totalorder %s18, 0
      %p132 = por %p130, %p131
      %p133 = scmp.ne.s32.totalorder %s125, %s127
      %p134 = scmp.eq.s32.totalorder %s23, 1
      %p135 = por %p133, %p134
      %p136 = scmp.ne.s32.totalorder %s127, %s128
      %p137 = scmp.eq.s32.totalorder %s23, 0
      %p138 = por %p136, %p137
      %p139 = scmp.ne.s32.totalorder %s127, %s128
      %p140 = scmp.eq.s32.totalorder %s24, 1
      %p141 = por %p139, %p140
      %p143 = scmp.ne.s32.totalorder %s128, %s142
      %p144 = scmp.eq.s32.totalorder %s24, 0
      %p145 = por %p143, %p144
      %p146 = scmp.le.s32.totalorder 1, %s18
      %p147 = scmp.lt.s32.totalorder %s18, 3
      %p148 = pnand %p146, %p147
      %p149 = pneg %p148
      // Predicated region
      $region9: #{seq2seq_forward.1} parent=5 // pred_check
        _
      $region10: #{seq2seq_forward.1} parent=5 // pred_check_branch
        %151 = sbr.rel (%p148) target = $region12
      $region11: #{seq2seq_forward.1} parent=5 // pred_region
        %s152 = ssub.s32 %s18, 1
        // Predicated region
        $region13: #{seq2seq_forward.1} parent=11 // pred_check
          %p153 = pneg %p39
        $region14: #{seq2seq_forward.1} parent=11 // pred_check_branch
          %155 = sbr.rel (%p153) target = $region16
        $region15: #{seq2seq_forward.1} parent=11 // pred_region
          %s157 = ssub.s32 256, 256
          %158 = vsyncadd [#allocation4], %s157
          %s159 = sshll.u32 [#allocation3], 4
          %s160 = int_to_ptr.vmem [resolvable:$true] %s159
          %165 = dma.hbm_to_vmem [thread:$0]  %s0, 256, %s160, [#allocation4], 128, 128, 8
        $region16: #{seq2seq_forward.1} parent=11 // pred_fallthru
          _
      $region12: #{seq2seq_forward.1} parent=5 // pred_fallthru
        _
      %p166 = scmp.lt.s32.totalorder %s18, 2
      // Predicated region
      $region17: #{seq2seq_forward.1} parent=5 // pred_check
        %p167 = pneg %p166
      $region18: #{seq2seq_forward.1} parent=5 // pred_check_branch
        %169 = sbr.rel (%p167) target = $region20
      $region19: #{seq2seq_forward.1} parent=5 // pred_region
        // Predicated region
        $region21: #{seq2seq_forward.1} parent=19 // pred_check
          %p170 = pneg %p59
        $region22: #{seq2seq_forward.1} parent=19 // pred_check_branch
          %172 = sbr.rel (%p170) target = $region24
        $region23: #{seq2seq_forward.1} parent=19 // pred_region
          %s173 = sand.u32 %s18, 1
          %s174 = scalar_lea.sflag [#allocation7], %s173
          %s175 = sand.u32 %s49, 1
          %s176 = smul.addr %s175, 384
          %s177 = scalar_lea.vmem [#allocation6], %s176
          %s179 = ssub.s32 6144, 6144
          %180 = vsyncadd %s174, %s179
          %s181 = smul.addr %s18, 96
          %s182 = smul.addr %s181, 64
          %s183 = scalar_lea.hbm %s1, %s182
          %s184 = sshll.u32 %s177, 4
          %s185 = int_to_ptr.vmem [resolvable:$true] %s184
          %190 = dma.hbm_to_vmem [thread:$0]  %s183, 6144, %s185, %s174, 384, 384, 24
        $region24: #{seq2seq_forward.1} parent=19 // pred_fallthru
          _
        // Predicated region
        $region25: #{seq2seq_forward.1} parent=19 // pred_check
          %p191 = pneg %p85
        $region26: #{seq2seq_forward.1} parent=19 // pred_check_branch
          %193 = sbr.rel (%p191) target = $region28
        $region27: #{seq2seq_forward.1} parent=19 // pred_region
          %s194 = sand.u32 %s18, 1
          %s195 = scalar_lea.sflag [#allocation7], %s194
          %s196 = sand.u32 %s75, 1
          %s197 = smul.addr %s196, 128
          %s198 = scalar_lea.vmem [#allocation8], %s197
          %s200 = ssub.s32 2048, 2048
          %201 = vsyncadd %s195, %s200
          %s202 = smul.addr %s18, 32
          %s203 = smul.addr %s202, 64
          %s204 = scalar_lea.hbm %s2, %s203
          %s205 = sshll.u32 %s198, 4
          %s206 = int_to_ptr.vmem [resolvable:$true] %s205
          %211 = dma.hbm_to_vmem [thread:$0]  %s204, 2048, %s206, %s195, 64, 64, 4
        $region28: #{seq2seq_forward.1} parent=19 // pred_fallthru
          _
        // Predicated region
        $region29: #{seq2seq_forward.1} parent=19 // pred_check
          %p212 = pneg %p111
        $region30: #{seq2seq_forward.1} parent=19 // pred_check_branch
          %214 = sbr.rel (%p212) target = $region32
        $region31: #{seq2seq_forward.1} parent=19 // pred_region
          %s215 = sand.u32 %s101, 1
          %s216 = scalar_lea.sflag [#allocation10], %s215
          %s217 = sand.u32 %s101, 1
          %s218 = smul.addr %s217, 24
          %s219 = scalar_lea.vmem [#allocation9], %s218
          %s221 = ssub.s32 384, 384
          %222 = vsyncadd %s216, %s221
          %s223 = smul.addr %s18, 3
          %s224 = smul.addr %s223, 128
          %s225 = scalar_lea.hbm %s3, %s224
          %s227 = sshll.u32 %s219, 4
          %s228 = int_to_ptr.vmem [resolvable:$true] %s227
          %230 = dma.hbm_to_vmem [thread:$0]  %s225, 384, %s228, %s216
        $region32: #{seq2seq_forward.1} parent=19 // pred_fallthru
          _
      $region20: #{seq2seq_forward.1} parent=5 // pred_fallthru
        _
      %p231 = scmp.le.s32.totalorder 1, %s18
      %p232 = scmp.lt.s32.totalorder %s18, 3
      %p233 = pnand %p231, %p232
      %p234 = pneg %p233
      // Predicated region
      $region33: #{seq2seq_forward.1} parent=5 // pred_check
        _
      $region34: #{seq2seq_forward.1} parent=5 // pred_check_branch
        %236 = sbr.rel (%p233) target = $region36
      $region35: #{seq2seq_forward.1} parent=5 // pred_region
        %s237 = ssub.s32 %s18, 1
        // Predicated region
        $region37: #{seq2seq_forward.1} parent=35 // pred_check
          %p238 = pneg %p39
        $region38: #{seq2seq_forward.1} parent=35 // pred_check_branch
          %240 = sbr.rel (%p238) target = $region40
        $region39: #{seq2seq_forward.1} parent=35 // pred_region
          %241 = dma.done [#allocation4], 256
        $region40: #{seq2seq_forward.1} parent=35 // pred_fallthru
          _
        %s242 = sand.u32 %s23, 1
        %s243 = scalar_lea.sflag [#allocation7], %s242
        %s244 = sand.u32 %s52, 1
        %s245 = smul.addr %s244, 384
        %s246 = scalar_lea.vmem [#allocation6], %s245
        // Predicated region
        $region41: #{seq2seq_forward.1} parent=35 // pred_check
          %p247 = pneg %p65
        $region42: #{seq2seq_forward.1} parent=35 // pred_check_branch
          %249 = sbr.rel (%p247) target = $region44
        $region43: #{seq2seq_forward.1} parent=35 // pred_region
          %250 = dma.done %s243, 6144
        $region44: #{seq2seq_forward.1} parent=35 // pred_fallthru
          _
        %s251 = sand.u32 %s23, 1
        %s252 = scalar_lea.sflag [#allocation7], %s251
        %s253 = sand.u32 %s78, 1
        %s254 = smul.addr %s253, 128
        %s255 = scalar_lea.vmem [#allocation8], %s254
        // Predicated region
        $region45: #{seq2seq_forward.1} parent=35 // pred_check
          %p256 = pneg %p91
        $region46: #{seq2seq_forward.1} parent=35 // pred_check_branch
          %258 = sbr.rel (%p256) target = $region48
        $region47: #{seq2seq_forward.1} parent=35 // pred_region
          %259 = dma.done %s252, 2048
        $region48: #{seq2seq_forward.1} parent=35 // pred_fallthru
          _
        %s260 = sand.u32 %s104, 1
        %s261 = scalar_lea.sflag [#allocation10], %s260
        %s262 = sand.u32 %s104, 1
        %s263 = smul.addr %s262, 24
        %s264 = scalar_lea.vmem [#allocation9], %s263
        // Predicated region
        $region49: #{seq2seq_forward.1} parent=35 // pred_check
          %p265 = pneg %p117
        $region50: #{seq2seq_forward.1} parent=35 // pred_check_branch
          %267 = sbr.rel (%p265) target = $region52
        $region51: #{seq2seq_forward.1} parent=35 // pred_region
          %268 = dma.done %s261, 384
        $region52: #{seq2seq_forward.1} parent=35 // pred_fallthru
          _
        %p269 = pneg %p39
        %p270 = pneg %p36
        %s271 = sand.u32 %s23, 1
        %s272 = scalar_lea.sflag [#allocation7], %s271
        %s273 = sand.u32 %s52, 1
        %s274 = smul.addr %s273, 384
        %s275 = scalar_lea.vmem [#allocation6], %s274
        %p276 = pneg %p65
        %p277 = pneg %p62
        %s278 = sand.u32 %s23, 1
        %s279 = scalar_lea.sflag [#allocation7], %s278
        %s280 = sand.u32 %s78, 1
        %s281 = smul.addr %s280, 128
        %s282 = scalar_lea.vmem [#allocation8], %s281
        %p283 = pneg %p91
        %p284 = pneg %p88
        %s285 = sand.u32 %s104, 1
        %s286 = scalar_lea.sflag [#allocation10], %s285
        %s287 = sand.u32 %s104, 1
        %s288 = smul.addr %s287, 24
        %s289 = scalar_lea.vmem [#allocation9], %s288
        %p290 = pneg %p117
        %p291 = pneg %p114
        %p292 = pneg %p138
        %p293 = pneg %p135
        %p295 = scmp.eq.s32.totalorder %s23, 0
        // Predicated region
        $region53: #{seq2seq_forward.1} parent=35 // pred_check
          %p296 = pneg %p295
        $region54: #{seq2seq_forward.1} parent=35 // pred_check_branch
          %298 = sbr.rel (%p296) target = $region56
        $region55: #{seq2seq_forward.1} parent=35 // pred_region
          %v299 = vld [vmem:[#allocation3] sm:$0xff]
          %v300 = vld [vmem:[#allocation3 + $0x8] sm:$0xff]
          %301 = vst [vmem:[#allocation2] sm:$0xff] %v299
          %302 = vst [vmem:[#allocation2 + $0x8] sm:$0xff] %v300
        $region56: #{seq2seq_forward.1} parent=35 // pred_fallthru
          _
        %v303 = vld [vmem:[#allocation2] sm:$0xff]
        %v304 = vld [vmem:[#allocation2 + $0x8] sm:$0xff]
        %v305 = vld [vmem:[%s246] sm:$0xff]
        %v306 = vld [vmem:[%s246 + $0x8] sm:$0xff]
        %v307 = vld [vmem:[%s246 + $0x10] sm:$0xff]
        %v308 = vld [vmem:[%s246 + $0x18] sm:$0xff]
        %v309 = vld [vmem:[%s246 + $0x20] sm:$0xff]
        %v310 = vld [vmem:[%s246 + $0x28] sm:$0xff]
        %v311 = vld [vmem:[%s246 + $0x30] sm:$0xff]
        %v312 = vld [vmem:[%s246 + $0x38] sm:$0xff]
        %v313 = vld [vmem:[%s246 + $0x40] sm:$0xff]
        %v314 = vld [vmem:[%s246 + $0x48] sm:$0xff]
        %v315 = vld [vmem:[%s246 + $0x50] sm:$0xff]
        %v316 = vld [vmem:[%s246 + $0x58] sm:$0xff]
        %v317 = vld [vmem:[%s246 + $0x60] sm:$0xff]
        %v318 = vld [vmem:[%s246 + $0x68] sm:$0xff]
        %v319 = vld [vmem:[%s246 + $0x70] sm:$0xff]
        %v320 = vld [vmem:[%s246 + $0x78] sm:$0xff]
        %v321 = vld [vmem:[%s246 + $0x80] sm:$0xff]
        %v322 = vld [vmem:[%s246 + $0x88] sm:$0xff]
        %v323 = vld [vmem:[%s246 + $0x90] sm:$0xff]
        %v324 = vld [vmem:[%s246 + $0x98] sm:$0xff]
        %v325 = vld [vmem:[%s246 + $0xa0] sm:$0xff]
        %v326 = vld [vmem:[%s246 + $0xa8] sm:$0xff]
        %v327 = vld [vmem:[%s246 + $0xb0] sm:$0xff]
        %v328 = vld [vmem:[%s246 + $0xb8] sm:$0xff]
        %v329 = vld [vmem:[%s246 + $0xc0] sm:$0xff]
        %v330 = vld [vmem:[%s246 + $0xc8] sm:$0xff]
        %v331 = vld [vmem:[%s246 + $0xd0] sm:$0xff]
        %v332 = vld [vmem:[%s246 + $0xd8] sm:$0xff]
        %v333 = vld [vmem:[%s246 + $0xe0] sm:$0xff]
        %v334 = vld [vmem:[%s246 + $0xe8] sm:$0xff]
        %v335 = vld [vmem:[%s246 + $0xf0] sm:$0xff]
        %v336 = vld [vmem:[%s246 + $0xf8] sm:$0xff]
        %v337 = vld [vmem:[%s246 + $0x100] sm:$0xff]
        %v338 = vld [vmem:[%s246 + $0x108] sm:$0xff]
        %v339 = vld [vmem:[%s246 + $0x110] sm:$0xff]
        %v340 = vld [vmem:[%s246 + $0x118] sm:$0xff]
        %v341 = vld [vmem:[%s246 + $0x120] sm:$0xff]
        %v342 = vld [vmem:[%s246 + $0x128] sm:$0xff]
        %v343 = vld [vmem:[%s246 + $0x130] sm:$0xff]
        %v344 = vld [vmem:[%s246 + $0x138] sm:$0xff]
        %v345 = vld [vmem:[%s246 + $0x140] sm:$0xff]
        %v346 = vld [vmem:[%s246 + $0x148] sm:$0xff]
        %v347 = vld [vmem:[%s246 + $0x150] sm:$0xff]
        %v348 = vld [vmem:[%s246 + $0x158] sm:$0xff]
        %v349 = vld [vmem:[%s246 + $0x160] sm:$0xff]
        %v350 = vld [vmem:[%s246 + $0x168] sm:$0xff]
        %v351 = vld [vmem:[%s246 + $0x170] sm:$0xff]
        %v352 = vld [vmem:[%s246 + $0x178] sm:$0xff]
        %v353 = vld [vmem:[%s255] sm:$0xf]
        %v354 = vld [vmem:[%s255 + $0x4] sm:$0xf]
        %v355 = vld [vmem:[%s255 + $0x8] sm:$0xf]
        %v356 = vld [vmem:[%s255 + $0xc] sm:$0xf]
        %v357 = vld [vmem:[%s255 + $0x10] sm:$0xf]
        %v358 = vld [vmem:[%s255 + $0x14] sm:$0xf]
        %v359 = vld [vmem:[%s255 + $0x18] sm:$0xf]
        %v360 = vld [vmem:[%s255 + $0x1c] sm:$0xf]
        %v361 = vld [vmem:[%s255 + $0x20] sm:$0xf]
        %v362 = vld [vmem:[%s255 + $0x24] sm:$0xf]
        %v363 = vld [vmem:[%s255 + $0x28] sm:$0xf]
        %v364 = vld [vmem:[%s255 + $0x2c] sm:$0xf]
        %v365 = vld [vmem:[%s255 + $0x30] sm:$0xf]
        %v366 = vld [vmem:[%s255 + $0x34] sm:$0xf]
        %v367 = vld [vmem:[%s255 + $0x38] sm:$0xf]
        %v368 = vld [vmem:[%s255 + $0x3c] sm:$0xf]
        %v369 = vld [vmem:[%s255 + $0x40] sm:$0xf]
        %v370 = vld [vmem:[%s255 + $0x44] sm:$0xf]
        %v371 = vld [vmem:[%s255 + $0x48] sm:$0xf]
        %v372 = vld [vmem:[%s255 + $0x4c] sm:$0xf]
        %v373 = vld [vmem:[%s255 + $0x50] sm:$0xf]
        %v374 = vld [vmem:[%s255 + $0x54] sm:$0xf]
        %v375 = vld [vmem:[%s255 + $0x58] sm:$0xf]
        %v376 = vld [vmem:[%s255 + $0x5c] sm:$0xf]
        %v377 = vld [vmem:[%s255 + $0x60] sm:$0xf]
        %v378 = vld [vmem:[%s255 + $0x64] sm:$0xf]
        %v379 = vld [vmem:[%s255 + $0x68] sm:$0xf]
        %v380 = vld [vmem:[%s255 + $0x6c] sm:$0xf]
        %v381 = vld [vmem:[%s255 + $0x70] sm:$0xf]
        %v382 = vld [vmem:[%s255 + $0x74] sm:$0xf]
        %v383 = vld [vmem:[%s255 + $0x78] sm:$0xf]
        %v384 = vld [vmem:[%s255 + $0x7c] sm:$0xf]
        %v385 = vld [vmem:[%s264] sm:$0xff]
        %v386 = vld [vmem:[%s264 + $0x8] sm:$0xff]
        %v387 = vld [vmem:[%s264 + $0x10] sm:$0xff]
        %v388 = vpack.c.bf16 %v304, %v303
        %v389 = vlaneseq
        %v390 = vshrl.u32 %v389, 7
        %v391 = vsub.s32 0, %v390
        %v392 = vrot.slane %v385, %v391
        %v393 = vlaneseq
        %v394 = vshrl.u32 %v393, 7
        %v395 = vsub.s32 0, %v394
        %v396 = vrot.slane %v386, %v395
        %v397 = vlaneseq
        %v398 = vshrl.u32 %v397, 7
        %v399 = vsub.s32 0, %v398
        %v400 = vrot.slane %v387, %v399
        %v433 = vunpack.c.l.b16 %v305
        %v434 = vunpack.c.h.b16 %v305
        %v435 = vunpack.c.l.b16 %v306
        %v436 = vunpack.c.l.b16 %v308
        %v437 = vunpack.c.h.b16 %v308
        %v438 = vunpack.c.l.b16 %v309
        %v439 = vunpack.c.l.b16 %v311
        %v440 = vunpack.c.h.b16 %v311
        %v441 = vunpack.c.l.b16 %v312
        %v442 = vunpack.c.l.b16 %v314
        %v443 = vunpack.c.h.b16 %v314
        %v444 = vunpack.c.l.b16 %v315
        %v445 = vunpack.c.l.b16 %v317
        %v446 = vunpack.c.h.b16 %v317
        %v447 = vunpack.c.l.b16 %v318
        %v448 = vunpack.c.l.b16 %v320
        %v449 = vunpack.c.h.b16 %v320
        %v450 = vunpack.c.l.b16 %v321
        %v451 = vunpack.c.l.b16 %v323
        %v452 = vunpack.c.h.b16 %v323
        %v453 = vunpack.c.l.b16 %v324
        %v454 = vunpack.c.l.b16 %v326
        %v455 = vunpack.c.h.b16 %v326
        %v456 = vunpack.c.l.b16 %v327
        %v457 = vunpack.c.l.b16 %v329
        %v458 = vunpack.c.h.b16 %v329
        %v459 = vunpack.c.l.b16 %v330
        %v460 = vunpack.c.l.b16 %v332
        %v461 = vunpack.c.h.b16 %v332
        %v462 = vunpack.c.l.b16 %v333
        %v463 = vunpack.c.l.b16 %v335
        %v464 = vunpack.c.h.b16 %v335
        %v465 = vunpack.c.l.b16 %v336
        %v466 = vunpack.c.l.b16 %v338
        %v467 = vunpack.c.h.b16 %v338
        %v468 = vunpack.c.l.b16 %v339
        %v469 = vunpack.c.l.b16 %v341
        %v470 = vunpack.c.h.b16 %v341
        %v471 = vunpack.c.l.b16 %v342
        %v472 = vunpack.c.l.b16 %v344
        %v473 = vunpack.c.h.b16 %v344
        %v474 = vunpack.c.l.b16 %v345
        %v475 = vunpack.c.l.b16 %v347
        %v476 = vunpack.c.h.b16 %v347
        %v477 = vunpack.c.l.b16 %v348
        %v478 = vunpack.c.l.b16 %v350
        %v479 = vunpack.c.h.b16 %v350
        %v480 = vunpack.c.l.b16 %v351
        %v481 = vpack.c.b16 %v436, %v433
        %v482 = vpack.c.b16 %v437, %v434
        %v483 = vpack.c.b16 %v438, %v435
        %v484 = vpack.c.b16 %v442, %v439
        %v485 = vpack.c.b16 %v443, %v440
        %v486 = vpack.c.b16 %v444, %v441
        %v487 = vpack.c.b16 %v448, %v445
        %v488 = vpack.c.b16 %v449, %v446
        %v489 = vpack.c.b16 %v450, %v447
        %v490 = vpack.c.b16 %v454, %v451
        %v491 = vpack.c.b16 %v455, %v452
        %v492 = vpack.c.b16 %v456, %v453
        %v493 = vpack.c.b16 %v460, %v457
        %v494 = vpack.c.b16 %v461, %v458
        %v495 = vpack.c.b16 %v462, %v459
        %v496 = vpack.c.b16 %v466, %v463
        %v497 = vpack.c.b16 %v467, %v464
        %v498 = vpack.c.b16 %v468, %v465
        %v499 = vpack.c.b16 %v472, %v469
        %v500 = vpack.c.b16 %v473, %v470
        %v501 = vpack.c.b16 %v474, %v471
        %v502 = vpack.c.b16 %v478, %v475
        %v503 = vpack.c.b16 %v479, %v476
        %v504 = vpack.c.b16 %v480, %v477
        %529 = vmatprep.subr.bf16.mxu0 %v482
        %530 = vmatpush1.bf16.msra.mxu0 %v481
        %531 = vmatprep.subr.bf16.mxu0 %v485
        %532 = vmatpush1.bf16.msra.mxu0 %v484
        %533 = vmatprep.subr.bf16.mxu0 %v488
        %534 = vmatpush1.bf16.msra.mxu0 %v487
        %535 = vmatprep.subr.bf16.mxu0 %v491
        %536 = vmatpush1.bf16.msra.mxu0 %v490
        %537 = vmatprep.subr.bf16.mxu0 %v494
        %538 = vmatpush1.bf16.msra.mxu0 %v493
        %539 = vmatprep.subr.bf16.mxu0 %v497
        %540 = vmatpush1.bf16.msra.mxu0 %v496
        %541 = vmatprep.subr.bf16.mxu0 %v500
        %542 = vmatpush1.bf16.msra.mxu0 %v499
        %543 = vmatprep.subr.bf16.mxu0 %v503
        %544 = vmatpush1.bf16.msra.mxu0 %v502
        %545 = vmatprep.subr.bf16.mxu0 0
        %546 = vmatpush1.bf16.msra.mxu0 0
        %547 = vmatprep.subr.bf16.mxu0 0
        %548 = vmatpush1.bf16.msra.mxu0 0
        %549 = vmatprep.subr.bf16.mxu0 0
        %550 = vmatpush1.bf16.msra.mxu0 0
        %551 = vmatprep.subr.bf16.mxu0 0
        %552 = vmatpush1.bf16.msra.mxu0 0
        %553 = vmatprep.subr.bf16.mxu0 0
        %554 = vmatpush1.bf16.msra.mxu0 0
        %555 = vmatprep.subr.bf16.mxu0 0
        %556 = vmatpush1.bf16.msra.mxu0 0
        %557 = vmatprep.subr.bf16.mxu0 0
        %558 = vmatpush1.bf16.msra.mxu0 0
        %559 = vmatprep.subr.bf16.mxu0 0
        %560 = vmatpush1.bf16.msra.mxu0 0
        %561 = vmatprep.mubr.bf16.mxu0 0
        %562 = vmatmul.mubr.bf16.gmra.mrb[0].mxu0 %v388
        %v563 = vpop.f32.mrb[0].mxu0
        %v564 = vadd.f32 %v392, %v563
        %v565 = vpop.f32.mrb[0].mxu0
        %v566 = vadd.f32 %v396, %v565
        %v567 = vpop.f32.mrb[0].mxu0
        %v568 = vadd.f32 %v392, %v567
        %v569 = vpop.f32.mrb[0].mxu0
        %v570 = vadd.f32 %v396, %v569
        %571 = vdwg.mxu0
        %572 = vmatprep.subr.bf16.mxu0 0
        %573 = vmatpush1.bf16.msra.mxu0 %v483
        %574 = vmatprep.subr.bf16.mxu0 0
        %575 = vmatpush1.bf16.msra.mxu0 %v486
        %576 = vmatprep.subr.bf16.mxu0 0
        %577 = vmatpush1.bf16.msra.mxu0 %v489
        %578 = vmatprep.subr.bf16.mxu0 0
        %579 = vmatpush1.bf16.msra.mxu0 %v492
        %580 = vmatprep.subr.bf16.mxu0 0
        %581 = vmatpush1.bf16.msra.mxu0 %v495
        %582 = vmatprep.subr.bf16.mxu0 0
        %583 = vmatpush1.bf16.msra.mxu0 %v498
        %584 = vmatprep.subr.bf16.mxu0 0
        %585 = vmatpush1.bf16.msra.mxu0 %v501
        %586 = vmatprep.subr.bf16.mxu0 0
        %587 = vmatpush1.bf16.msra.mxu0 %v504
        %588 = vmatprep.subr.bf16.mxu0 0
        %589 = vmatpush1.bf16.msra.mxu0 0
        %590 = vmatprep.subr.bf16.mxu0 0
        %591 = vmatpush1.bf16.msra.mxu0 0
        %592 = vmatprep.subr.bf16.mxu0 0
        %593 = vmatpush1.bf16.msra.mxu0 0
        %594 = vmatprep.subr.bf16.mxu0 0
        %595 = vmatpush1.bf16.msra.mxu0 0
        %596 = vmatprep.subr.bf16.mxu0 0
        %597 = vmatpush1.bf16.msra.mxu0 0
        %598 = vmatprep.subr.bf16.mxu0 0
        %599 = vmatpush1.bf16.msra.mxu0 0
        %600 = vmatprep.subr.bf16.mxu0 0
        %601 = vmatpush1.bf16.msra.mxu0 0
        %602 = vmatprep.subr.bf16.mxu0 0
        %603 = vmatpush1.bf16.msra.mxu0 0
        %604 = vmatprep.mubr.bf16.mxu0 0
        %605 = vmatmul.mubr.bf16.gmra.mrb[0].mxu0 %v388
        %v606 = vpop.f32.mrb[0].mxu0
        %v607 = vadd.f32 %v400, %v606
        %v608 = vpop.f32.mrb[0].mxu0
        %v609 = vpop.f32.mrb[0].mxu0
        %v610 = vadd.f32 %v400, %v609
        %v611 = vpop.f32.mrb[0].mxu0
        %612 = vdwg.mxu0
        %v613 = vpack.c.bf16 %v568, %v564
        %v615 = vunpack.c.l.b16 %v613
        %v616 = vunpack.c.h.b16 %v613
        %v617 = vpack.c.b16 %v615, %v615
        %v618 = vpack.c.b16 %v616, %v616
        %v619 = vpack.c.bf16 %v570, %v566
        %v621 = vunpack.c.l.b16 %v619
        %v622 = vunpack.c.h.b16 %v619
        %v623 = vpack.c.b16 %v621, %v621
        %v624 = vpack.c.b16 %v622, %v622
        %v625 = vpack.c.bf16 %v610, %v607
        %v627 = vunpack.c.l.b16 %v625
        %v628 = vunpack.c.h.b16 %v625
        %v629 = vpack.c.b16 %v627, %v627
        %v630 = vpack.c.b16 %v628, %v628
        %vm631 = vcmask 261120
        %v633 = vsel %vm631, %v617, 0
        %v636 = vsel %vm631, %v623, 0
        %638 = vmatprep.subr.bf16.mxu0 0
        %639 = vmatpush1.bf16.xpose.msra.mxu0 %v636
        %640 = vmatprep.subr.bf16.mxu0 0
        %641 = vmatpush1.bf16.xpose.msra.mxu0 0
        %642 = vmatprep.subr.bf16.mxu0 0
        %643 = vmatpush1.bf16.xpose.msra.mxu0 0
        %644 = vmatprep.subr.bf16.mxu0 0
        %645 = vmatpush1.bf16.xpose.msra.mxu0 0
        %646 = vmatprep.subr.bf16.mxu0 0
        %647 = vmatpush1.bf16.xpose.msra.mxu0 0
        %648 = vmatprep.subr.bf16.mxu0 0
        %649 = vmatpush1.bf16.xpose.msra.mxu0 0
        %650 = vmatprep.subr.bf16.mxu0 0
        %651 = vmatpush1.bf16.xpose.msra.mxu0 0
        %652 = vmatprep.subr.bf16.mxu0 0
        %653 = vmatpush1.bf16.xpose.msra.mxu0 0
        %654 = vmatprep.subr.bf16.mxu0 0
        %655 = vmatpush1.bf16.xpose.msra.mxu0 0
        %656 = vmatprep.subr.bf16.mxu0 0
        %657 = vmatpush1.bf16.xpose.msra.mxu0 0
        %658 = vmatprep.subr.bf16.mxu0 0
        %659 = vmatpush1.bf16.xpose.msra.mxu0 0
        %660 = vmatprep.subr.bf16.mxu0 0
        %661 = vmatpush1.bf16.xpose.msra.mxu0 0
        %662 = vmatprep.subr.bf16.mxu0 0
        %663 = vmatpush1.bf16.xpose.msra.mxu0 0
        %664 = vmatprep.subr.bf16.mxu0 0
        %665 = vmatpush1.bf16.xpose.msra.mxu0 0
        %666 = vmatprep.subr.bf16.mxu0 0
        %667 = vmatpush1.bf16.xpose.msra.mxu0 0
        %668 = vmatprep.subr.bf16.mxu0 0
        %669 = vmatpush1.bf16.xpose.msra.mxu0 0
        %670 = vmatprep.mubr.bf16.mxu0 0
        %671 = vmatmul.mubr.bf16.gmra.mrb[0].mxu0 %v633
        %v672 = vpop.f32.mrb[0].mxu0
        %v673 = vadd.f32 0.0, %v672
        %v674 = vpop.f32.mrb[0].mxu0
        %v675 = vpop.f32.mrb[0].mxu0
        %v676 = vpop.f32.mrb[0].mxu0
        %677 = vdwg.mxu0
        %v679 = vsel %vm631, %v618, 0
        %v682 = vsel %vm631, %v624, 0
        %684 = vmatprep.subr.bf16.mxu0 0
        %685 = vmatpush1.bf16.xpose.msra.mxu0 %v682
        %686 = vmatprep.subr.bf16.mxu0 0
        %687 = vmatpush1.bf16.xpose.msra.mxu0 0
        %688 = vmatprep.subr.bf16.mxu0 0
        %689 = vmatpush1.bf16.xpose.msra.mxu0 0
        %690 = vmatprep.subr.bf16.mxu0 0
        %691 = vmatpush1.bf16.xpose.msra.mxu0 0
        %692 = vmatprep.subr.bf16.mxu0 0
        %693 = vmatpush1.bf16.xpose.msra.mxu0 0
        %694 = vmatprep.subr.bf16.mxu0 0
        %695 = vmatpush1.bf16.xpose.msra.mxu0 0
        %696 = vmatprep.subr.bf16.mxu0 0
        %697 = vmatpush1.bf16.xpose.msra.mxu0 0
        %698 = vmatprep.subr.bf16.mxu0 0
        %699 = vmatpush1.bf16.xpose.msra.mxu0 0
        %700 = vmatprep.subr.bf16.mxu0 0
        %701 = vmatpush1.bf16.xpose.msra.mxu0 0
        %702 = vmatprep.subr.bf16.mxu0 0
        %703 = vmatpush1.bf16.xpose.msra.mxu0 0
        %704 = vmatprep.subr.bf16.mxu0 0
        %705 = vmatpush1.bf16.xpose.msra.mxu0 0
        %706 = vmatprep.subr.bf16.mxu0 0
        %707 = vmatpush1.bf16.xpose.msra.mxu0 0
        %708 = vmatprep.subr.bf16.mxu0 0
        %709 = vmatpush1.bf16.xpose.msra.mxu0 0
        %710 = vmatprep.subr.bf16.mxu0 0
        %711 = vmatpush1.bf16.xpose.msra.mxu0 0
        %712 = vmatprep.subr.bf16.mxu0 0
        %713 = vmatpush1.bf16.xpose.msra.mxu0 0
        %714 = vmatprep.subr.bf16.mxu0 0
        %715 = vmatpush1.bf16.xpose.msra.mxu0 0
        %716 = vmatprep.mubr.bf16.mxu0 0
        %717 = vmatmul.mubr.bf16.gmra.mrb[0].mxu0 %v679
        %v718 = vpop.f32.mrb[0].mxu0
        %v719 = vadd.f32 0.0, %v718
        %v720 = vpop.f32.mrb[0].mxu0
        %v721 = vpop.f32.mrb[0].mxu0
        %v722 = vpop.f32.mrb[0].mxu0
        %723 = vdwg.mxu0
        %vm724 = vcmask 64512
        %v725 = vsel %vm724, %v673, -inf
        %726 = vmax.xlane.f32.xlu0 %v725
        %v727 = vpop.xlane.xlu0 %726
        %v728 = vsel %vm724, %v719, -inf
        %729 = vmax.xlane.f32.xlu0 %v728
        %v730 = vpop.xlane.xlu0 %729
        %v731 = vsub.f32 %v673, %v727
        %v732 = vsub.f32 %v719, %v730
        %v733 = vmul.f32 %v731, 1.442695
        %v734 = vpow.pop %v733
        %v735 = vmul.f32 %v732, 1.442695
        %v736 = vpow.pop %v735
        %v737 = vsel %vm724, %v734, 0.0
        %738 = vadd.xlane.f32.xlu0 %v737
        %v739 = vpop.xlane.xlu0 %738
        %v740 = vsel %vm724, %v736, 0.0
        %741 = vadd.xlane.f32.xlu0 %v740
        %v742 = vpop.xlane.xlu0 %741
        %v743 = vrcp.pop %v739
        %v744 = vrcp.pop %v742
        %v745 = vmul.f32 %v734, %v743
        %v746 = vmul.f32 %v736, %v744
        %v747 = vpack.c.bf16 %v745, %v745
        %v748 = vpack.c.bf16 %v746, %v746
        %v750 = vsel %vm724, %v747, 0
        %vm752 = vcmask 1043456
        %v754 = vsel %vm752, %v629, 0
        %756 = vmatprep.subr.bf16.mxu0 0
        %757 = vmatpush1.bf16.msra.mxu0 %v754
        %758 = vmatprep.subr.bf16.mxu0 0
        %759 = vmatpush1.bf16.msra.mxu0 0
        %760 = vmatprep.subr.bf16.mxu0 0
        %761 = vmatpush1.bf16.msra.mxu0 0
        %762 = vmatprep.subr.bf16.mxu0 0
        %763 = vmatpush1.bf16.msra.mxu0 0
        %764 = vmatprep.subr.bf16.mxu0 0
        %765 = vmatpush1.bf16.msra.mxu0 0
        %766 = vmatprep.subr.bf16.mxu0 0
        %767 = vmatpush1.bf16.msra.mxu0 0
        %768 = vmatprep.subr.bf16.mxu0 0
        %769 = vmatpush1.bf16.msra.mxu0 0
        %770 = vmatprep.subr.bf16.mxu0 0
        %771 = vmatpush1.bf16.msra.mxu0 0
        %772 = vmatprep.subr.bf16.mxu0 0
        %773 = vmatpush1.bf16.msra.mxu0 0
        %774 = vmatprep.subr.bf16.mxu0 0
        %775 = vmatpush1.bf16.msra.mxu0 0
        %776 = vmatprep.subr.bf16.mxu0 0
        %777 = vmatpush1.bf16.msra.mxu0 0
        %778 = vmatprep.subr.bf16.mxu0 0
        %779 = vmatpush1.bf16.msra.mxu0 0
        %780 = vmatprep.subr.bf16.mxu0 0
        %781 = vmatpush1.bf16.msra.mxu0 0
        %782 = vmatprep.subr.bf16.mxu0 0
        %783 = vmatpush1.bf16.msra.mxu0 0
        %784 = vmatprep.subr.bf16.mxu0 0
        %785 = vmatpush1.bf16.msra.mxu0 0
        %786 = vmatprep.subr.bf16.mxu0 0
        %787 = vmatpush1.bf16.msra.mxu0 0
        %788 = vmatprep.mubr.bf16.mxu0 0
        %789 = vmatmul.mubr.bf16.gmra.mrb[0].mxu0 %v750
        %v790 = vpop.f32.mrb[0].mxu0
        %v791 = vadd.f32 0.0, %v790
        %v792 = vpop.f32.mrb[0].mxu0
        %v793 = vpop.f32.mrb[0].mxu0
        %v794 = vpop.f32.mrb[0].mxu0
        %795 = vdwg.mxu0
        %v797 = vsel %vm724, %v748, 0
        %v800 = vsel %vm752, %v630, 0
        %802 = vmatprep.subr.bf16.mxu0 0
        %803 = vmatpush1.bf16.msra.mxu0 %v800
        %804 = vmatprep.subr.bf16.mxu0 0
        %805 = vmatpush1.bf16.msra.mxu0 0
        %806 = vmatprep.subr.bf16.mxu0 0
        %807 = vmatpush1.bf16.msra.mxu0 0
        %808 = vmatprep.subr.bf16.mxu0 0
        %809 = vmatpush1.bf16.msra.mxu0 0
        %810 = vmatprep.subr.bf16.mxu0 0
        %811 = vmatpush1.bf16.msra.mxu0 0
        %812 = vmatprep.subr.bf16.mxu0 0
        %813 = vmatpush1.bf16.msra.mxu0 0
        %814 = vmatprep.subr.bf16.mxu0 0
        %815 = vmatpush1.bf16.msra.mxu0 0
        %816 = vmatprep.subr.bf16.mxu0 0
        %817 = vmatpush1.bf16.msra.mxu0 0
        %818 = vmatprep.subr.bf16.mxu0 0
        %819 = vmatpush1.bf16.msra.mxu0 0
        %820 = vmatprep.subr.bf16.mxu0 0
        %821 = vmatpush1.bf16.msra.mxu0 0
        %822 = vmatprep.subr.bf16.mxu0 0
        %823 = vmatpush1.bf16.msra.mxu0 0
        %824 = vmatprep.subr.bf16.mxu0 0
        %825 = vmatpush1.bf16.msra.mxu0 0
        %826 = vmatprep.subr.bf16.mxu0 0
        %827 = vmatpush1.bf16.msra.mxu0 0
        %828 = vmatprep.subr.bf16.mxu0 0
        %829 = vmatpush1.bf16.msra.mxu0 0
        %830 = vmatprep.subr.bf16.mxu0 0
        %831 = vmatpush1.bf16.msra.mxu0 0
        %832 = vmatprep.subr.bf16.mxu0 0
        %833 = vmatpush1.bf16.msra.mxu0 0
        %834 = vmatprep.mubr.bf16.mxu0 0
        %835 = vmatmul.mubr.bf16.gmra.mrb[0].mxu0 %v797
        %v836 = vpop.f32.mrb[0].mxu0
        %v837 = vadd.f32 0.0, %v836
        %v838 = vpop.f32.mrb[0].mxu0
        %v839 = vpop.f32.mrb[0].mxu0
        %v840 = vpop.f32.mrb[0].mxu0
        %841 = vdwg.mxu0
        %842 = vrot.lane.b32.xlu0 %v617, 96
        %v843 = vpop.permute.xlu0 %842
        %844 = vrot.lane.b32.xlu0 %v623, 96
        %v845 = vpop.permute.xlu0 %844
        %v847 = vsel %vm631, %v843, 0
        %v850 = vsel %vm631, %v845, 0
        %852 = vmatprep.subr.bf16.mxu0 0
        %853 = vmatpush1.bf16.xpose.msra.mxu0 %v850
        %854 = vmatprep.subr.bf16.mxu0 0
        %855 = vmatpush1.bf16.xpose.msra.mxu0 0
        %856 = vmatprep.subr.bf16.mxu0 0
        %857 = vmatpush1.bf16.xpose.msra.mxu0 0
        %858 = vmatprep.subr.bf16.mxu0 0
        %859 = vmatpush1.bf16.xpose.msra.mxu0 0
        %860 = vmatprep.subr.bf16.mxu0 0
        %861 = vmatpush1.bf16.xpose.msra.mxu0 0
        %862 = vmatprep.subr.bf16.mxu0 0
        %863 = vmatpush1.bf16.xpose.msra.mxu0 0
        %864 = vmatprep.subr.bf16.mxu0 0
        %865 = vmatpush1.bf16.xpose.msra.mxu0 0
        %866 = vmatprep.subr.bf16.mxu0 0
        %867 = vmatpush1.bf16.xpose.msra.mxu0 0
        %868 = vmatprep.subr.bf16.mxu0 0
        %869 = vmatpush1.bf16.xpose.msra.mxu0 0
        %870 = vmatprep.subr.bf16.mxu0 0
        %871 = vmatpush1.bf16.xpose.msra.mxu0 0
        %872 = vmatprep.subr.bf16.mxu0 0
        %873 = vmatpush1.bf16.xpose.msra.mxu0 0
        %874 = vmatprep.subr.bf16.mxu0 0
        %875 = vmatpush1.bf16.xpose.msra.mxu0 0
        %876 = vmatprep.subr.bf16.mxu0 0
        %877 = vmatpush1.bf16.xpose.msra.mxu0 0
        %878 = vmatprep.subr.bf16.mxu0 0
        %879 = vmatpush1.bf16.xpose.msra.mxu0 0
        %880 = vmatprep.subr.bf16.mxu0 0
        %881 = vmatpush1.bf16.xpose.msra.mxu0 0
        %882 = vmatprep.subr.bf16.mxu0 0
        %883 = vmatpush1.bf16.xpose.msra.mxu0 0
        %884 = vmatprep.mubr.bf16.mxu0 0
        %885 = vmatmul.mubr.bf16.gmra.mrb[0].mxu0 %v847
        %v886 = vpop.f32.mrb[0].mxu0
        %v887 = vadd.f32 0.0, %v886
        %v888 = vpop.f32.mrb[0].mxu0
        %v889 = vpop.f32.mrb[0].mxu0
        %v890 = vpop.f32.mrb[0].mxu0
        %891 = vdwg.mxu0
        %892 = vrot.lane.b32.xlu0 %v618, 96
        %v893 = vpop.permute.xlu0 %892
        %894 = vrot.lane.b32.xlu0 %v624, 96
        %v895 = vpop.permute.xlu0 %894
        %v897 = vsel %vm631, %v893, 0
        %v900 = vsel %vm631, %v895, 0
        %902 = vmatprep.subr.bf16.mxu0 0
        %903 = vmatpush1.bf16.xpose.msra.mxu0 %v900
        %904 = vmatprep.subr.bf16.mxu0 0
        %905 = vmatpush1.bf16.xpose.msra.mxu0 0
        %906 = vmatprep.subr.bf16.mxu0 0
        %907 = vmatpush1.bf16.xpose.msra.mxu0 0
        %908 = vmatprep.subr.bf16.mxu0 0
        %909 = vmatpush1.bf16.xpose.msra.mxu0 0
        %910 = vmatprep.subr.bf16.mxu0 0
        %911 = vmatpush1.bf16.xpose.msra.mxu0 0
        %912 = vmatprep.subr.bf16.mxu0 0
        %913 = vmatpush1.bf16.xpose.msra.mxu0 0
        %914 = vmatprep.subr.bf16.mxu0 0
        %915 = vmatpush1.bf16.xpose.msra.mxu0 0
        %916 = vmatprep.subr.bf16.mxu0 0
        %917 = vmatpush1.bf16.xpose.msra.mxu0 0
        %918 = vmatprep.subr.bf16.mxu0 0
        %919 = vmatpush1.bf16.xpose.msra.mxu0 0
        %920 = vmatprep.subr.bf16.mxu0 0
        %921 = vmatpush1.bf16.xpose.msra.mxu0 0
        %922 = vmatprep.subr.bf16.mxu0 0
        %923 = vmatpush1.bf16.xpose.msra.mxu0 0
        %924 = vmatprep.subr.bf16.mxu0 0
        %925 = vmatpush1.bf16.xpose.msra.mxu0 0
        %926 = vmatprep.subr.bf16.mxu0 0
        %927 = vmatpush1.bf16.xpose.msra.mxu0 0
        %928 = vmatprep.subr.bf16.mxu0 0
        %929 = vmatpush1.bf16.xpose.msra.mxu0 0
        %930 = vmatprep.subr.bf16.mxu0 0
        %931 = vmatpush1.bf16.xpose.msra.mxu0 0
        %932 = vmatprep.subr.bf16.mxu0 0
        %933 = vmatpush1.bf16.xpose.msra.mxu0 0
        %934 = vmatprep.mubr.bf16.mxu0 0
        %935 = vmatmul.mubr.bf16.gmra.mrb[0].mxu0 %v897
        %v936 = vpop.f32.mrb[0].mxu0
        %v937 = vadd.f32 0.0, %v936
        %v938 = vpop.f32.mrb[0].mxu0
        %v939 = vpop.f32.mrb[0].mxu0
        %v940 = vpop.f32.mrb[0].mxu0
        %941 = vdwg.mxu0
        %v942 = vsel %vm724, %v887, -inf
        %943 = vmax.xlane.f32.xlu0 %v942
        %v944 = vpop.xlane.xlu0 %943
        %v945 = vsel %vm724, %v937, -inf
        %946 = vmax.xlane.f32.xlu0 %v945
        %v947 = vpop.xlane.xlu0 %946
        %v948 = vsub.f32 %v887, %v944
        %v949 = vsub.f32 %v937, %v947
        %v950 = vmul.f32 %v948, 1.442695
        %v951 = vpow.pop %v950
        %v952 = vmul.f32 %v949, 1.442695
        %v953 = vpow.pop %v952
        %v954 = vsel %vm724, %v951, 0.0
        %955 = vadd.xlane.f32.xlu0 %v954
        %v956 = vpop.xlane.xlu0 %955
        %v957 = vsel %vm724, %v953, 0.0
        %958 = vadd.xlane.f32.xlu0 %v957
        %v959 = vpop.xlane.xlu0 %958
        %v960 = vrcp.pop %v956
        %v961 = vrcp.pop %v959
        %v962 = vmul.f32 %v951, %v960
        %v963 = vmul.f32 %v953, %v961
        %v964 = vpack.c.bf16 %v962, %v962
        %v965 = vpack.c.bf16 %v963, %v963
        %966 = vrot.lane.b32.xlu0 %v629, 96
        %v967 = vpop.permute.xlu0 %966
        %v969 = vsel %vm724, %v964, 0
        %v972 = vsel %vm752, %v967, 0
        %974 = vmatprep.subr.bf16.mxu0 0
        %975 = vmatpush1.bf16.msra.mxu0 %v972
        %976 = vmatprep.subr.bf16.mxu0 0
        %977 = vmatpush1.bf16.msra.mxu0 0
        %978 = vmatprep.subr.bf16.mxu0 0
        %979 = vmatpush1.bf16.msra.mxu0 0
        %980 = vmatprep.subr.bf16.mxu0 0
        %981 = vmatpush1.bf16.msra.mxu0 0
        %982 = vmatprep.subr.bf16.mxu0 0
        %983 = vmatpush1.bf16.msra.mxu0 0
        %984 = vmatprep.subr.bf16.mxu0 0
        %985 = vmatpush1.bf16.msra.mxu0 0
        %986 = vmatprep.subr.bf16.mxu0 0
        %987 = vmatpush1.bf16.msra.mxu0 0
        %988 = vmatprep.subr.bf16.mxu0 0
        %989 = vmatpush1.bf16.msra.mxu0 0
        %990 = vmatprep.subr.bf16.mxu0 0
        %991 = vmatpush1.bf16.msra.mxu0 0
        %992 = vmatprep.subr.bf16.mxu0 0
        %993 = vmatpush1.bf16.msra.mxu0 0
        %994 = vmatprep.subr.bf16.mxu0 0
        %995 = vmatpush1.bf16.msra.mxu0 0
        %996 = vmatprep.subr.bf16.mxu0 0
        %997 = vmatpush1.bf16.msra.mxu0 0
        %998 = vmatprep.subr.bf16.mxu0 0
        %999 = vmatpush1.bf16.msra.mxu0 0
        %1000 = vmatprep.subr.bf16.mxu0 0
        %1001 = vmatpush1.bf16.msra.mxu0 0
        %1002 = vmatprep.subr.bf16.mxu0 0
        %1003 = vmatpush1.bf16.msra.mxu0 0
        %1004 = vmatprep.subr.bf16.mxu0 0
        %1005 = vmatpush1.bf16.msra.mxu0 0
        %1006 = vmatprep.mubr.bf16.mxu0 0
        %1007 = vmatmul.mubr.bf16.gmra.mrb[0].mxu0 %v969
        %v1008 = vpop.f32.mrb[0].mxu0
        %v1009 = vadd.f32 0.0, %v1008
        %v1010 = vpop.f32.mrb[0].mxu0
        %v1011 = vpop.f32.mrb[0].mxu0
        %v1012 = vpop.f32.mrb[0].mxu0
        %1013 = vdwg.mxu0
        %1014 = vrot.lane.b32.xlu0 %v630, 96
        %v1015 = vpop.permute.xlu0 %1014
        %v1017 = vsel %vm724, %v965, 0
        %v1020 = vsel %vm752, %v1015, 0
        %1022 = vmatprep.subr.bf16.mxu0 0
        %1023 = vmatpush1.bf16.msra.mxu0 %v1020
        %1024 = vmatprep.subr.bf16.mxu0 0
        %1025 = vmatpush1.bf16.msra.mxu0 0
        %1026 = vmatprep.subr.bf16.mxu0 0
        %1027 = vmatpush1.bf16.msra.mxu0 0
        %1028 = vmatprep.subr.bf16.mxu0 0
        %1029 = vmatpush1.bf16.msra.mxu0 0
        %1030 = vmatprep.subr.bf16.mxu0 0
        %1031 = vmatpush1.bf16.msra.mxu0 0
        %1032 = vmatprep.subr.bf16.mxu0 0
        %1033 = vmatpush1.bf16.msra.mxu0 0
        %1034 = vmatprep.subr.bf16.mxu0 0
        %1035 = vmatpush1.bf16.msra.mxu0 0
        %1036 = vmatprep.subr.bf16.mxu0 0
        %1037 = vmatpush1.bf16.msra.mxu0 0
        %1038 = vmatprep.subr.bf16.mxu0 0
        %1039 = vmatpush1.bf16.msra.mxu0 0
        %1040 = vmatprep.subr.bf16.mxu0 0
        %1041 = vmatpush1.bf16.msra.mxu0 0
        %1042 = vmatprep.subr.bf16.mxu0 0
        %1043 = vmatpush1.bf16.msra.mxu0 0
        %1044 = vmatprep.subr.bf16.mxu0 0
        %1045 = vmatpush1.bf16.msra.mxu0 0
        %1046 = vmatprep.subr.bf16.mxu0 0
        %1047 = vmatpush1.bf16.msra.mxu0 0
        %1048 = vmatprep.subr.bf16.mxu0 0
        %1049 = vmatpush1.bf16.msra.mxu0 0
        %1050 = vmatprep.subr.bf16.mxu0 0
        %1051 = vmatpush1.bf16.msra.mxu0 0
        %1052 = vmatprep.subr.bf16.mxu0 0
        %1053 = vmatpush1.bf16.msra.mxu0 0
        %1054 = vmatprep.mubr.bf16.mxu0 0
        %1055 = vmatmul.mubr.bf16.gmra.mrb[0].mxu0 %v1017
        %v1056 = vpop.f32.mrb[0].mxu0
        %v1057 = vadd.f32 0.0, %v1056
        %v1058 = vpop.f32.mrb[0].mxu0
        %v1059 = vpop.f32.mrb[0].mxu0
        %v1060 = vpop.f32.mrb[0].mxu0
        %1061 = vdwg.mxu0
        %1062 = vrot.lane.b32.xlu0 %v617, 64
        %v1063 = vpop.permute.xlu0 %1062
        %1064 = vrot.lane.b32.xlu0 %v623, 64
        %v1065 = vpop.permute.xlu0 %1064
        %v1067 = vsel %vm631, %v1063, 0
        %v1070 = vsel %vm631, %v1065, 0
        %1072 = vmatprep.subr.bf16.mxu0 0
        %1073 = vmatpush1.bf16.xpose.msra.mxu0 %v1070
        %1074 = vmatprep.subr.bf16.mxu0 0
        %1075 = vmatpush1.bf16.xpose.msra.mxu0 0
        %1076 = vmatprep.subr.bf16.mxu0 0
        %1077 = vmatpush1.bf16.xpose.msra.mxu0 0
        %1078 = vmatprep.subr.bf16.mxu0 0
        %1079 = vmatpush1.bf16.xpose.msra.mxu0 0
        %1080 = vmatprep.subr.bf16.mxu0 0
        %1081 = vmatpush1.bf16.xpose.msra.mxu0 0
        %1082 = vmatprep.subr.bf16.mxu0 0
        %1083 = vmatpush1.bf16.xpose.msra.mxu0 0
        %1084 = vmatprep.subr.bf16.mxu0 0
        %1085 = vmatpush1.bf16.xpose.msra.mxu0 0
        %1086 = vmatprep.subr.bf16.mxu0 0
        %1087 = vmatpush1.bf16.xpose.msra.mxu0 0
        %1088 = vmatprep.subr.bf16.mxu0 0
        %1089 = vmatpush1.bf16.xpose.msra.mxu0 0
        %1090 = vmatprep.subr.bf16.mxu0 0
        %1091 = vmatpush1.bf16.xpose.msra.mxu0 0
        %1092 = vmatprep.subr.bf16.mxu0 0
        %1093 = vmatpush1.bf16.xpose.msra.mxu0 0
        %1094 = vmatprep.subr.bf16.mxu0 0
        %1095 = vmatpush1.bf16.xpose.msra.mxu0 0
        %1096 = vmatprep.subr.bf16.mxu0 0
        %1097 = vmatpush1.bf16.xpose.msra.mxu0 0
        %1098 = vmatprep.subr.bf16.mxu0 0
        %1099 = vmatpush1.bf16.xpose.msra.mxu0 0
        %1100 = vmatprep.subr.bf16.mxu0 0
        %1101 = vmatpush1.bf16.xpose.msra.mxu0 0
        %1102 = vmatprep.subr.bf16.mxu0 0
        %1103 = vmatpush1.bf16.xpose.msra.mxu0 0
        %1104 = vmatprep.mubr.bf16.mxu0 0
        %1105 = vmatmul.mubr.bf16.gmra.mrb[0].mxu0 %v1067
        %v1106 = vpop.f32.mrb[0].mxu0
        %v1107 = vadd.f32 0.0, %v1106
        %v1108 = vpop.f32.mrb[0].mxu0
        %v1109 = vpop.f32.mrb[0].mxu0
        %v1110 = vpop.f32.mrb[0].mxu0
        %1111 = vdwg.mxu0
        %1112 = vrot.lane.b32.xlu0 %v618, 64
        %v1113 = vpop.permute.xlu0 %1112
        %1114 = vrot.lane.b32.xlu0 %v624, 64
        %v1115 = vpop.permute.xlu0 %1114
        %v1117 = vsel %vm631, %v1113, 0
        %v1120 = vsel %vm631, %v1115, 0
        %1122 = vmatprep.subr.bf16.mxu0 0
        %1123 = vmatpush1.bf16.xpose.msra.mxu0 %v1120
        %1124 = vmatprep.subr.bf16.mxu0 0
        %1125 = vmatpush1.bf16.xpose.msra.mxu0 0
        %1126 = vmatprep.subr.bf16.mxu0 0
        %1127 = vmatpush1.bf16.xpose.msra.mxu0 0
        %1128 = vmatprep.subr.bf16.mxu0 0
        %1129 = vmatpush1.bf16.xpose.msra.mxu0 0
        %1130 = vmatprep.subr.bf16.mxu0 0
        %1131 = vmatpush1.bf16.xpose.msra.mxu0 0
        %1132 = vmatprep.subr.bf16.mxu0 0
        %1133 = vmatpush1.bf16.xpose.msra.mxu0 0
        %1134 = vmatprep.subr.bf16.mxu0 0
        %1135 = vmatpush1.bf16.xpose.msra.mxu0 0
        %1136 = vmatprep.subr.bf16.mxu0 0
        %1137 = vmatpush1.bf16.xpose.msra.mxu0 0
        %1138 = vmatprep.subr.bf16.mxu0 0
        %1139 = vmatpush1.bf16.xpose.msra.mxu0 0
        %1140 = vmatprep.subr.bf16.mxu0 0
        %1141 = vmatpush1.bf16.xpose.msra.mxu0 0
        %1142 = vmatprep.subr.bf16.mxu0 0
        %1143 = vmatpush1.bf16.xpose.msra.mxu0 0
        %1144 = vmatprep.subr.bf16.mxu0 0
        %1145 = vmatpush1.bf16.xpose.msra.mxu0 0
        %1146 = vmatprep.subr.bf16.mxu0 0
        %1147 = vmatpush1.bf16.xpose.msra.mxu0 0
        %1148 = vmatprep.subr.bf16.mxu0 0
        %1149 = vmatpush1.bf16.xpose.msra.mxu0 0
        %1150 = vmatprep.subr.bf16.mxu0 0
        %1151 = vmatpush1.bf16.xpose.msra.mxu0 0
        %1152 = vmatprep.subr.bf16.mxu0 0
        %1153 = vmatpush1.bf16.xpose.msra.mxu0 0
        %1154 = vmatprep.mubr.bf16.mxu0 0
        %1155 = vmatmul.mubr.bf16.gmra.mrb[0].mxu0 %v1117
        %v1156 = vpop.f32.mrb[0].mxu0
        %v1157 = vadd.f32 0.0, %v1156
        %v1158 = vpop.f32.mrb[0].mxu0
        %v1159 = vpop.f32.mrb[0].mxu0
        %v1160 = vpop.f32.mrb[0].mxu0
        %1161 = vdwg.mxu0
        %v1162 = vsel %vm724, %v1107, -inf
        %1163 = vmax.xlane.f32.xlu0 %v1162
        %v1164 = vpop.xlane.xlu0 %1163
        %v1165 = vsel %vm724, %v1157, -inf
        %1166 = vmax.xlane.f32.xlu0 %v1165
        %v1167 = vpop.xlane.xlu0 %1166
        %v1168 = vsub.f32 %v1107, %v1164
        %v1169 = vsub.f32 %v1157, %v1167
        %v1170 = vmul.f32 %v1168, 1.442695
        %v1171 = vpow.pop %v1170
        %v1172 = vmul.f32 %v1169, 1.442695
        %v1173 = vpow.pop %v1172
        %v1174 = vsel %vm724, %v1171, 0.0
        %1175 = vadd.xlane.f32.xlu0 %v1174
        %v1176 = vpop.xlane.xlu0 %1175
        %v1177 = vsel %vm724, %v1173, 0.0
        %1178 = vadd.xlane.f32.xlu0 %v1177
        %v1179 = vpop.xlane.xlu0 %1178
        %v1180 = vrcp.pop %v1176
        %v1181 = vrcp.pop %v1179
        %v1182 = vmul.f32 %v1171, %v1180
        %v1183 = vmul.f32 %v1173, %v1181
        %v1184 = vpack.c.bf16 %v1182, %v1182
        %v1185 = vpack.c.bf16 %v1183, %v1183
        %1186 = vrot.lane.b32.xlu0 %v629, 64
        %v1187 = vpop.permute.xlu0 %1186
        %v1189 = vsel %vm724, %v1184, 0
        %v1192 = vsel %vm752, %v1187, 0
        %1194 = vmatprep.subr.bf16.mxu0 0
        %1195 = vmatpush1.bf16.msra.mxu0 %v1192
        %1196 = vmatprep.subr.bf16.mxu0 0
        %1197 = vmatpush1.bf16.msra.mxu0 0
        %1198 = vmatprep.subr.bf16.mxu0 0
        %1199 = vmatpush1.bf16.msra.mxu0 0
        %1200 = vmatprep.subr.bf16.mxu0 0
        %1201 = vmatpush1.bf16.msra.mxu0 0
        %1202 = vmatprep.subr.bf16.mxu0 0
        %1203 = vmatpush1.bf16.msra.mxu0 0
        %1204 = vmatprep.subr.bf16.mxu0 0
        %1205 = vmatpush1.bf16.msra.mxu0 0
        %1206 = vmatprep.subr.bf16.mxu0 0
        %1207 = vmatpush1.bf16.msra.mxu0 0
        %1208 = vmatprep.subr.bf16.mxu0 0
        %1209 = vmatpush1.bf16.msra.mxu0 0
        %1210 = vmatprep.subr.bf16.mxu0 0
        %1211 = vmatpush1.bf16.msra.mxu0 0
        %1212 = vmatprep.subr.bf16.mxu0 0
        %1213 = vmatpush1.bf16.msra.mxu0 0
        %1214 = vmatprep.subr.bf16.mxu0 0
        %1215 = vmatpush1.bf16.msra.mxu0 0
        %1216 = vmatprep.subr.bf16.mxu0 0
        %1217 = vmatpush1.bf16.msra.mxu0 0
        %1218 = vmatprep.subr.bf16.mxu0 0
        %1219 = vmatpush1.bf16.msra.mxu0 0
        %1220 = vmatprep.subr.bf16.mxu0 0
        %1221 = vmatpush1.bf16.msra.mxu0 0
        %1222 = vmatprep.subr.bf16.mxu0 0
        %1223 = vmatpush1.bf16.msra.mxu0 0
        %1224 = vmatprep.subr.bf16.mxu0 0
        %1225 = vmatpush1.bf16.msra.mxu0 0
        %1226 = vmatprep.mubr.bf16.mxu0 0
        %1227 = vmatmul.mubr.bf16.gmra.mrb[0].mxu0 %v1189
        %v1228 = vpop.f32.mrb[0].mxu0
        %v1229 = vadd.f32 0.0, %v1228
        %v1230 = vpop.f32.mrb[0].mxu0
        %v1231 = vpop.f32.mrb[0].mxu0
        %v1232 = vpop.f32.mrb[0].mxu0
        %1233 = vdwg.mxu0
        %1234 = vrot.lane.b32.xlu0 %v630, 64
        %v1235 = vpop.permute.xlu0 %1234
        %v1237 = vsel %vm724, %v1185, 0
        %v1240 = vsel %vm752, %v1235, 0
        %1242 = vmatprep.subr.bf16.mxu0 0
        %1243 = vmatpush1.bf16.msra.mxu0 %v1240
        %1244 = vmatprep.subr.bf16.mxu0 0
        %1245 = vmatpush1.bf16.msra.mxu0 0
        %1246 = vmatprep.subr.bf16.mxu0 0
        %1247 = vmatpush1.bf16.msra.mxu0 0
        %1248 = vmatprep.subr.bf16.mxu0 0
        %1249 = vmatpush1.bf16.msra.mxu0 0
        %1250 = vmatprep.subr.bf16.mxu0 0
        %1251 = vmatpush1.bf16.msra.mxu0 0
        %1252 = vmatprep.subr.bf16.mxu0 0
        %1253 = vmatpush1.bf16.msra.mxu0 0
        %1254 = vmatprep.subr.bf16.mxu0 0
        %1255 = vmatpush1.bf16.msra.mxu0 0
        %1256 = vmatprep.subr.bf16.mxu0 0
        %1257 = vmatpush1.bf16.msra.mxu0 0
        %1258 = vmatprep.subr.bf16.mxu0 0
        %1259 = vmatpush1.bf16.msra.mxu0 0
        %1260 = vmatprep.subr.bf16.mxu0 0
        %1261 = vmatpush1.bf16.msra.mxu0 0
        %1262 = vmatprep.subr.bf16.mxu0 0
        %1263 = vmatpush1.bf16.msra.mxu0 0
        %1264 = vmatprep.subr.bf16.mxu0 0
        %1265 = vmatpush1.bf16.msra.mxu0 0
        %1266 = vmatprep.subr.bf16.mxu0 0
        %1267 = vmatpush1.bf16.msra.mxu0 0
        %1268 = vmatprep.subr.bf16.mxu0 0
        %1269 = vmatpush1.bf16.msra.mxu0 0
        %1270 = vmatprep.subr.bf16.mxu0 0
        %1271 = vmatpush1.bf16.msra.mxu0 0
        %1272 = vmatprep.subr.bf16.mxu0 0
        %1273 = vmatpush1.bf16.msra.mxu0 0
        %1274 = vmatprep.mubr.bf16.mxu0 0
        %1275 = vmatmul.mubr.bf16.gmra.mrb[0].mxu0 %v1237
        %v1276 = vpop.f32.mrb[0].mxu0
        %v1277 = vadd.f32 0.0, %v1276
        %v1278 = vpop.f32.mrb[0].mxu0
        %v1279 = vpop.f32.mrb[0].mxu0
        %v1280 = vpop.f32.mrb[0].mxu0
        %1281 = vdwg.mxu0
        %1282 = vrot.lane.b32.xlu0 %v617, 32
        %v1283 = vpop.permute.xlu0 %1282
        %1284 = vrot.lane.b32.xlu0 %v623, 32
        %v1285 = vpop.permute.xlu0 %1284
        %v1287 = vsel %vm631, %v1283, 0
        %v1290 = vsel %vm631, %v1285, 0
        %1292 = vmatprep.subr.bf16.mxu0 0
        %1293 = vmatpush1.bf16.xpose.msra.mxu0 %v1290
        %1294 = vmatprep.subr.bf16.mxu0 0
        %1295 = vmatpush1.bf16.xpose.msra.mxu0 0
        %1296 = vmatprep.subr.bf16.mxu0 0
        %1297 = vmatpush1.bf16.xpose.msra.mxu0 0
        %1298 = vmatprep.subr.bf16.mxu0 0
        %1299 = vmatpush1.bf16.xpose.msra.mxu0 0
        %1300 = vmatprep.subr.bf16.mxu0 0
        %1301 = vmatpush1.bf16.xpose.msra.mxu0 0
        %1302 = vmatprep.subr.bf16.mxu0 0
        %1303 = vmatpush1.bf16.xpose.msra.mxu0 0
        %1304 = vmatprep.subr.bf16.mxu0 0
        %1305 = vmatpush1.bf16.xpose.msra.mxu0 0
        %1306 = vmatprep.subr.bf16.mxu0 0
        %1307 = vmatpush1.bf16.xpose.msra.mxu0 0
        %1308 = vmatprep.subr.bf16.mxu0 0
        %1309 = vmatpush1.bf16.xpose.msra.mxu0 0
        %1310 = vmatprep.subr.bf16.mxu0 0
        %1311 = vmatpush1.bf16.xpose.msra.mxu0 0
        %1312 = vmatprep.subr.bf16.mxu0 0
        %1313 = vmatpush1.bf16.xpose.msra.mxu0 0
        %1314 = vmatprep.subr.bf16.mxu0 0
        %1315 = vmatpush1.bf16.xpose.msra.mxu0 0
        %1316 = vmatprep.subr.bf16.mxu0 0
        %1317 = vmatpush1.bf16.xpose.msra.mxu0 0
        %1318 = vmatprep.subr.bf16.mxu0 0
        %1319 = vmatpush1.bf16.xpose.msra.mxu0 0
        %1320 = vmatprep.subr.bf16.mxu0 0
        %1321 = vmatpush1.bf16.xpose.msra.mxu0 0
        %1322 = vmatprep.subr.bf16.mxu0 0
        %1323 = vmatpush1.bf16.xpose.msra.mxu0 0
        %1324 = vmatprep.mubr.bf16.mxu0 0
        %1325 = vmatmul.mubr.bf16.gmra.mrb[0].mxu0 %v1287
        %v1326 = vpop.f32.mrb[0].mxu0
        %v1327 = vadd.f32 0.0, %v1326
        %v1328 = vpop.f32.mrb[0].mxu0
        %v1329 = vpop.f32.mrb[0].mxu0
        %v1330 = vpop.f32.mrb[0].mxu0
        %1331 = vdwg.mxu0
        %1332 = vrot.lane.b32.xlu0 %v618, 32
        %v1333 = vpop.permute.xlu0 %1332
        %1334 = vrot.lane.b32.xlu0 %v624, 32
        %v1335 = vpop.permute.xlu0 %1334
        %v1337 = vsel %vm631, %v1333, 0
        %v1340 = vsel %vm631, %v1335, 0
        %1342 = vmatprep.subr.bf16.mxu0 0
        %1343 = vmatpush1.bf16.xpose.msra.mxu0 %v1340
        %1344 = vmatprep.subr.bf16.mxu0 0
        %1345 = vmatpush1.bf16.xpose.msra.mxu0 0
        %1346 = vmatprep.subr.bf16.mxu0 0
        %1347 = vmatpush1.bf16.xpose.msra.mxu0 0
        %1348 = vmatprep.subr.bf16.mxu0 0
        %1349 = vmatpush1.bf16.xpose.msra.mxu0 0
        %1350 = vmatprep.subr.bf16.mxu0 0
        %1351 = vmatpush1.bf16.xpose.msra.mxu0 0
        %1352 = vmatprep.subr.bf16.mxu0 0
        %1353 = vmatpush1.bf16.xpose.msra.mxu0 0
        %1354 = vmatprep.subr.bf16.mxu0 0
        %1355 = vmatpush1.bf16.xpose.msra.mxu0 0
        %1356 = vmatprep.subr.bf16.mxu0 0
        %1357 = vmatpush1.bf16.xpose.msra.mxu0 0
        %1358 = vmatprep.subr.bf16.mxu0 0
        %1359 = vmatpush1.bf16.xpose.msra.mxu0 0
        %1360 = vmatprep.subr.bf16.mxu0 0
        %1361 = vmatpush1.bf16.xpose.msra.mxu0 0
        %1362 = vmatprep.subr.bf16.mxu0 0
        %1363 = vmatpush1.bf16.xpose.msra.mxu0 0
        %1364 = vmatprep.subr.bf16.mxu0 0
        %1365 = vmatpush1.bf16.xpose.msra.mxu0 0
        %1366 = vmatprep.subr.bf16.mxu0 0
        %1367 = vmatpush1.bf16.xpose.msra.mxu0 0
        %1368 = vmatprep.subr.bf16.mxu0 0
        %1369 = vmatpush1.bf16.xpose.msra.mxu0 0
        %1370 = vmatprep.subr.bf16.mxu0 0
        %1371 = vmatpush1.bf16.xpose.msra.mxu0 0
        %1372 = vmatprep.subr.bf16.mxu0 0
        %1373 = vmatpush1.bf16.xpose.msra.mxu0 0
        %1374 = vmatprep.mubr.bf16.mxu0 0
        %1375 = vmatmul.mubr.bf16.gmra.mrb[0].mxu0 %v1337
        %v1376 = vpop.f32.mrb[0].mxu0
        %v1377 = vadd.f32 0.0, %v1376
        %v1378 = vpop.f32.mrb[0].mxu0
        %v1379 = vpop.f32.mrb[0].mxu0
        %v1380 = vpop.f32.mrb[0].mxu0
        %1381 = vdwg.mxu0
        %v1382 = vsel %vm724, %v1327, -inf
        %1383 = vmax.xlane.f32.xlu0 %v1382
        %v1384 = vpop.xlane.xlu0 %1383
        %v1385 = vsel %vm724, %v1377, -inf
        %1386 = vmax.xlane.f32.xlu0 %v1385
        %v1387 = vpop.xlane.xlu0 %1386
        %v1388 = vsub.f32 %v1327, %v1384
        %v1389 = vsub.f32 %v1377, %v1387
        %v1390 = vmul.f32 %v1388, 1.442695
        %v1391 = vpow.pop %v1390
        %v1392 = vmul.f32 %v1389, 1.442695
        %v1393 = vpow.pop %v1392
        %v1394 = vsel %vm724, %v1391, 0.0
        %1395 = vadd.xlane.f32.xlu0 %v1394
        %v1396 = vpop.xlane.xlu0 %1395
        %v1397 = vsel %vm724, %v1393, 0.0
        %1398 = vadd.xlane.f32.xlu0 %v1397
        %v1399 = vpop.xlane.xlu0 %1398
        %v1400 = vrcp.pop %v1396
        %v1401 = vrcp.pop %v1399
        %v1402 = vmul.f32 %v1391, %v1400
        %v1403 = vmul.f32 %v1393, %v1401
        %v1404 = vpack.c.bf16 %v1402, %v1402
        %v1405 = vpack.c.bf16 %v1403, %v1403
        %1406 = vrot.lane.b32.xlu0 %v629, 32
        %v1407 = vpop.permute.xlu0 %1406
        %v1409 = vsel %vm724, %v1404, 0
        %v1412 = vsel %vm752, %v1407, 0
        %1414 = vmatprep.subr.bf16.mxu0 0
        %1415 = vmatpush1.bf16.msra.mxu0 %v1412
        %1416 = vmatprep.subr.bf16.mxu0 0
        %1417 = vmatpush1.bf16.msra.mxu0 0
        %1418 = vmatprep.subr.bf16.mxu0 0
        %1419 = vmatpush1.bf16.msra.mxu0 0
        %1420 = vmatprep.subr.bf16.mxu0 0
        %1421 = vmatpush1.bf16.msra.mxu0 0
        %1422 = vmatprep.subr.bf16.mxu0 0
        %1423 = vmatpush1.bf16.msra.mxu0 0
        %1424 = vmatprep.subr.bf16.mxu0 0
        %1425 = vmatpush1.bf16.msra.mxu0 0
        %1426 = vmatprep.subr.bf16.mxu0 0
        %1427 = vmatpush1.bf16.msra.mxu0 0
        %1428 = vmatprep.subr.bf16.mxu0 0
        %1429 = vmatpush1.bf16.msra.mxu0 0
        %1430 = vmatprep.subr.bf16.mxu0 0
        %1431 = vmatpush1.bf16.msra.mxu0 0
        %1432 = vmatprep.subr.bf16.mxu0 0
        %1433 = vmatpush1.bf16.msra.mxu0 0
        %1434 = vmatprep.subr.bf16.mxu0 0
        %1435 = vmatpush1.bf16.msra.mxu0 0
        %1436 = vmatprep.subr.bf16.mxu0 0
        %1437 = vmatpush1.bf16.msra.mxu0 0
        %1438 = vmatprep.subr.bf16.mxu0 0
        %1439 = vmatpush1.bf16.msra.mxu0 0
        %1440 = vmatprep.subr.bf16.mxu0 0
        %1441 = vmatpush1.bf16.msra.mxu0 0
        %1442 = vmatprep.subr.bf16.mxu0 0
        %1443 = vmatpush1.bf16.msra.mxu0 0
        %1444 = vmatprep.subr.bf16.mxu0 0
        %1445 = vmatpush1.bf16.msra.mxu0 0
        %1446 = vmatprep.mubr.bf16.mxu0 0
        %1447 = vmatmul.mubr.bf16.gmra.mrb[0].mxu0 %v1409
        %v1448 = vpop.f32.mrb[0].mxu0
        %v1449 = vadd.f32 0.0, %v1448
        %v1450 = vpop.f32.mrb[0].mxu0
        %v1451 = vpop.f32.mrb[0].mxu0
        %v1452 = vpop.f32.mrb[0].mxu0
        %1453 = vdwg.mxu0
        %1454 = vrot.lane.b32.xlu0 %v630, 32
        %v1455 = vpop.permute.xlu0 %1454
        %v1457 = vsel %vm724, %v1405, 0
        %v1460 = vsel %vm752, %v1455, 0
        %1462 = vmatprep.subr.bf16.mxu0 0
        %1463 = vmatpush1.bf16.msra.mxu0 %v1460
        %1464 = vmatprep.subr.bf16.mxu0 0
        %1465 = vmatpush1.bf16.msra.mxu0 0
        %1466 = vmatprep.subr.bf16.mxu0 0
        %1467 = vmatpush1.bf16.msra.mxu0 0
        %1468 = vmatprep.subr.bf16.mxu0 0
        %1469 = vmatpush1.bf16.msra.mxu0 0
        %1470 = vmatprep.subr.bf16.mxu0 0
        %1471 = vmatpush1.bf16.msra.mxu0 0
        %1472 = vmatprep.subr.bf16.mxu0 0
        %1473 = vmatpush1.bf16.msra.mxu0 0
        %1474 = vmatprep.subr.bf16.mxu0 0
        %1475 = vmatpush1.bf16.msra.mxu0 0
        %1476 = vmatprep.subr.bf16.mxu0 0
        %1477 = vmatpush1.bf16.msra.mxu0 0
        %1478 = vmatprep.subr.bf16.mxu0 0
        %1479 = vmatpush1.bf16.msra.mxu0 0
        %1480 = vmatprep.subr.bf16.mxu0 0
        %1481 = vmatpush1.bf16.msra.mxu0 0
        %1482 = vmatprep.subr.bf16.mxu0 0
        %1483 = vmatpush1.bf16.msra.mxu0 0
        %1484 = vmatprep.subr.bf16.mxu0 0
        %1485 = vmatpush1.bf16.msra.mxu0 0
        %1486 = vmatprep.subr.bf16.mxu0 0
        %1487 = vmatpush1.bf16.msra.mxu0 0
        %1488 = vmatprep.subr.bf16.mxu0 0
        %1489 = vmatpush1.bf16.msra.mxu0 0
        %1490 = vmatprep.subr.bf16.mxu0 0
        %1491 = vmatpush1.bf16.msra.mxu0 0
        %1492 = vmatprep.subr.bf16.mxu0 0
        %1493 = vmatpush1.bf16.msra.mxu0 0
        %1494 = vmatprep.mubr.bf16.mxu0 0
        %1495 = vmatmul.mubr.bf16.gmra.mrb[0].mxu0 %v1457
        %v1496 = vpop.f32.mrb[0].mxu0
        %v1497 = vadd.f32 0.0, %v1496
        %v1498 = vpop.f32.mrb[0].mxu0
        %v1499 = vpop.f32.mrb[0].mxu0
        %v1500 = vpop.f32.mrb[0].mxu0
        %1501 = vdwg.mxu0
        %1504 = vrot.lane.b32.xlu0 %v1009, 32
        %v1505 = vpop.permute.xlu0 %1504
        %1506 = vrot.lane.b32.xlu0 %v1057, 32
        %v1507 = vpop.permute.xlu0 %1506
        %1512 = vrot.lane.b32.xlu0 %v1229, 64
        %v1513 = vpop.permute.xlu0 %1512
        %1514 = vrot.lane.b32.xlu0 %v1277, 64
        %v1515 = vpop.permute.xlu0 %1514
        %1520 = vrot.lane.b32.xlu0 %v1449, 96
        %v1521 = vpop.permute.xlu0 %1520
        %1522 = vrot.lane.b32.xlu0 %v1497, 96
        %v1523 = vpop.permute.xlu0 %1522
        %v1526 = vsel %vm631, %v791, %v1505
        %v1527 = vsel %vm631, %v837, %v1507
        %vm1528 = vcmask 523264
        %v1529 = vsel %vm1528, %v1526, %v1513
        %v1530 = vsel %vm1528, %v1527, %v1515
        %vm1531 = vcmask 785408
        %v1532 = vsel %vm1531, %v1529, %v1521
        %v1533 = vsel %vm1531, %v1530, %v1523
        %v1534 = vpack.c.bf16 %v1533, %v1532
        %v1535 = vlaneseq
        %v1536 = vshrl.u32 %v1535, 7
        %v1537 = vsub.s32 2, %v1536
        %v1538 = vrot.slane %v385, %v1537
        %v1539 = vunpack.c.h.b16 %v306
        %v1540 = vunpack.c.h.b16 %v309
        %v1541 = vunpack.c.h.b16 %v312
        %v1542 = vunpack.c.h.b16 %v315
        %v1543 = vunpack.c.h.b16 %v318
        %v1544 = vunpack.c.h.b16 %v321
        %v1545 = vunpack.c.h.b16 %v324
        %v1546 = vunpack.c.h.b16 %v327
        %v1547 = vunpack.c.h.b16 %v330
        %v1548 = vunpack.c.h.b16 %v333
        %v1549 = vunpack.c.h.b16 %v336
        %v1550 = vunpack.c.h.b16 %v339
        %v1551 = vunpack.c.h.b16 %v342
        %v1552 = vunpack.c.h.b16 %v345
        %v1553 = vunpack.c.h.b16 %v348
        %v1554 = vunpack.c.h.b16 %v351
        %v1555 = vpack.c.b16 %v1540, %v1539
        %v1556 = vpack.c.b16 %v1542, %v1541
        %v1557 = vpack.c.b16 %v1544, %v1543
        %v1558 = vpack.c.b16 %v1546, %v1545
        %v1559 = vpack.c.b16 %v1548, %v1547
        %v1560 = vpack.c.b16 %v1550, %v1549
        %v1561 = vpack.c.b16 %v1552, %v1551
        %v1562 = vpack.c.b16 %v1554, %v1553
        %1571 = vmatprep.subr.bf16.mxu0 0
        %1572 = vmatpush1.bf16.msra.mxu0 %v1555
        %1573 = vmatprep.subr.bf16.mxu0 0
        %1574 = vmatpush1.bf16.msra.mxu0 %v1556
        %1575 = vmatprep.subr.bf16.mxu0 0
        %1576 = vmatpush1.bf16.msra.mxu0 %v1557
        %1577 = vmatprep.subr.bf16.mxu0 0
        %1578 = vmatpush1.bf16.msra.mxu0 %v1558
        %1579 = vmatprep.subr.bf16.mxu0 0
        %1580 = vmatpush1.bf16.msra.mxu0 %v1559
        %1581 = vmatprep.subr.bf16.mxu0 0
        %1582 = vmatpush1.bf16.msra.mxu0 %v1560
        %1583 = vmatprep.subr.bf16.mxu0 0
        %1584 = vmatpush1.bf16.msra.mxu0 %v1561
        %1585 = vmatprep.subr.bf16.mxu0 0
        %1586 = vmatpush1.bf16.msra.mxu0 %v1562
        %1587 = vmatprep.subr.bf16.mxu0 0
        %1588 = vmatpush1.bf16.msra.mxu0 0
        %1589 = vmatprep.subr.bf16.mxu0 0
        %1590 = vmatpush1.bf16.msra.mxu0 0
        %1591 = vmatprep.subr.bf16.mxu0 0
        %1592 = vmatpush1.bf16.msra.mxu0 0
        %1593 = vmatprep.subr.bf16.mxu0 0
        %1594 = vmatpush1.bf16.msra.mxu0 0
        %1595 = vmatprep.subr.bf16.mxu0 0
        %1596 = vmatpush1.bf16.msra.mxu0 0
        %1597 = vmatprep.subr.bf16.mxu0 0
        %1598 = vmatpush1.bf16.msra.mxu0 0
        %1599 = vmatprep.subr.bf16.mxu0 0
        %1600 = vmatpush1.bf16.msra.mxu0 0
        %1601 = vmatprep.subr.bf16.mxu0 0
        %1602 = vmatpush1.bf16.msra.mxu0 0
        %1603 = vmatprep.mubr.bf16.mxu0 0
        %1604 = vmatmul.mubr.bf16.gmra.mrb[0].mxu0 %v1534
        %v1605 = vpop.f32.mrb[0].mxu0
        %v1606 = vadd.f32 %v1538, %v1605
        %v1607 = vpop.f32.mrb[0].mxu0
        %v1608 = vpop.f32.mrb[0].mxu0
        %v1609 = vadd.f32 %v1538, %v1608
        %v1610 = vpop.f32.mrb[0].mxu0
        %1611 = vdwg.mxu0
        %v1612 = vadd.f32 %v303, %v1606
        %v1613 = vadd.f32 %v304, %v1609
        %1614 = vadd.xlane.f32.xlu0 %v1612
        %v1615 = vpop.xlane.xlu0 %1614
        %1616 = vadd.xlane.f32.xlu0 %v1613
        %v1617 = vpop.xlane.xlu0 %1616
        %v1618 = vrcp.pop 128.0
        %v1619 = vmul.f32 %v1615, %v1618
        %v1620 = vmul.f32 %v1617, %v1618
        %v1621 = vsub.f32 %v1612, %v1619
        %v1622 = vsub.f32 %v1613, %v1620
        %v1623 = vmul.f32 %v1621, %v1621
        %v1624 = vmul.f32 %v1622, %v1622
        %1625 = vadd.xlane.f32.xlu0 %v1623
        %v1626 = vpop.xlane.xlu0 %1625
        %1627 = vadd.xlane.f32.xlu0 %v1624
        %v1628 = vpop.xlane.xlu0 %1627
        %v1629 = vmul.f32 %v1626, %v1618
        %v1630 = vmul.f32 %v1628, %v1618
        %v1631 = vadd.f32 %v1629, 1e-05
        %v1632 = vadd.f32 %v1630, 1e-05
        %v1633 = vrsqrt.pop %v1631
        %v1634 = vrsqrt.pop %v1632
        %v1635 = vmul.f32 %v1621, %v1633
        %v1636 = vmul.f32 %v1622, %v1634
        %v1637 = vlaneseq
        %v1638 = vshrl.u32 %v1637, 7
        %v1639 = vsub.s32 2, %v1638
        %v1640 = vrot.slane %v386, %v1639
        %v1641 = vmul.f32 %v1635, %v1640
        %v1642 = vmul.f32 %v1636, %v1640
        %v1643 = vlaneseq
        %v1644 = vshrl.u32 %v1643, 7
        %v1645 = vsub.s32 2, %v1644
        %v1646 = vrot.slane %v387, %v1645
        %v1647 = vadd.f32 %v1641, %v1646
        %v1648 = vadd.f32 %v1642, %v1646
        %v1649 = vpack.c.bf16 %v1648, %v1647
        %v1650 = vlaneseq
        %v1651 = vshrl.u32 %v1650, 7
        %v1652 = vsub.s32 1, %v1651
        %v1653 = vrot.slane %v385, %v1652
        %v1654 = vlaneseq
        %v1655 = vshrl.u32 %v1654, 7
        %v1656 = vsub.s32 1, %v1655
        %v1657 = vrot.slane %v386, %v1656
        %v1674 = vunpack.c.l.b16 %v307
        %v1675 = vunpack.c.h.b16 %v307
        %v1676 = vunpack.c.l.b16 %v310
        %v1677 = vunpack.c.h.b16 %v310
        %v1678 = vunpack.c.l.b16 %v313
        %v1679 = vunpack.c.h.b16 %v313
        %v1680 = vunpack.c.l.b16 %v316
        %v1681 = vunpack.c.h.b16 %v316
        %v1682 = vunpack.c.l.b16 %v319
        %v1683 = vunpack.c.h.b16 %v319
        %v1684 = vunpack.c.l.b16 %v322
        %v1685 = vunpack.c.h.b16 %v322
        %v1686 = vunpack.c.l.b16 %v325
        %v1687 = vunpack.c.h.b16 %v325
        %v1688 = vunpack.c.l.b16 %v328
        %v1689 = vunpack.c.h.b16 %v328
        %v1690 = vunpack.c.l.b16 %v331
        %v1691 = vunpack.c.h.b16 %v331
        %v1692 = vunpack.c.l.b16 %v334
        %v1693 = vunpack.c.h.b16 %v334
        %v1694 = vunpack.c.l.b16 %v337
        %v1695 = vunpack.c.h.b16 %v337
        %v1696 = vunpack.c.l.b16 %v340
        %v1697 = vunpack.c.h.b16 %v340
        %v1698 = vunpack.c.l.b16 %v343
        %v1699 = vunpack.c.h.b16 %v343
        %v1700 = vunpack.c.l.b16 %v346
        %v1701 = vunpack.c.h.b16 %v346
        %v1702 = vunpack.c.l.b16 %v349
        %v1703 = vunpack.c.h.b16 %v349
        %v1704 = vunpack.c.l.b16 %v352
        %v1705 = vunpack.c.h.b16 %v352
        %v1706 = vpack.c.b16 %v1676, %v1674
        %v1707 = vpack.c.b16 %v1677, %v1675
        %v1708 = vpack.c.b16 %v1680, %v1678
        %v1709 = vpack.c.b16 %v1681, %v1679
        %v1710 = vpack.c.b16 %v1684, %v1682
        %v1711 = vpack.c.b16 %v1685, %v1683
        %v1712 = vpack.c.b16 %v1688, %v1686
        %v1713 = vpack.c.b16 %v1689, %v1687
        %v1714 = vpack.c.b16 %v1692, %v1690
        %v1715 = vpack.c.b16 %v1693, %v1691
        %v1716 = vpack.c.b16 %v1696, %v1694
        %v1717 = vpack.c.b16 %v1697, %v1695
        %v1718 = vpack.c.b16 %v1700, %v1698
        %v1719 = vpack.c.b16 %v1701, %v1699
        %v1720 = vpack.c.b16 %v1704, %v1702
        %v1721 = vpack.c.b16 %v1705, %v1703
        %1738 = vmatprep.subr.bf16.mxu0 %v1707
        %1739 = vmatpush1.bf16.msra.mxu0 %v1706
        %1740 = vmatprep.subr.bf16.mxu0 %v1709
        %1741 = vmatpush1.bf16.msra.mxu0 %v1708
        %1742 = vmatprep.subr.bf16.mxu0 %v1711
        %1743 = vmatpush1.bf16.msra.mxu0 %v1710
        %1744 = vmatprep.subr.bf16.mxu0 %v1713
        %1745 = vmatpush1.bf16.msra.mxu0 %v1712
        %1746 = vmatprep.subr.bf16.mxu0 %v1715
        %1747 = vmatpush1.bf16.msra.mxu0 %v1714
        %1748 = vmatprep.subr.bf16.mxu0 %v1717
        %1749 = vmatpush1.bf16.msra.mxu0 %v1716
        %1750 = vmatprep.subr.bf16.mxu0 %v1719
        %1751 = vmatpush1.bf16.msra.mxu0 %v1718
        %1752 = vmatprep.subr.bf16.mxu0 %v1721
        %1753 = vmatpush1.bf16.msra.mxu0 %v1720
        %1754 = vmatprep.subr.bf16.mxu0 0
        %1755 = vmatpush1.bf16.msra.mxu0 0
        %1756 = vmatprep.subr.bf16.mxu0 0
        %1757 = vmatpush1.bf16.msra.mxu0 0
        %1758 = vmatprep.subr.bf16.mxu0 0
        %1759 = vmatpush1.bf16.msra.mxu0 0
        %1760 = vmatprep.subr.bf16.mxu0 0
        %1761 = vmatpush1.bf16.msra.mxu0 0
        %1762 = vmatprep.subr.bf16.mxu0 0
        %1763 = vmatpush1.bf16.msra.mxu0 0
        %1764 = vmatprep.subr.bf16.mxu0 0
        %1765 = vmatpush1.bf16.msra.mxu0 0
        %1766 = vmatprep.subr.bf16.mxu0 0
        %1767 = vmatpush1.bf16.msra.mxu0 0
        %1768 = vmatprep.subr.bf16.mxu0 0
        %1769 = vmatpush1.bf16.msra.mxu0 0
        %1770 = vmatprep.mubr.bf16.mxu0 0
        %1771 = vmatmul.mubr.bf16.gmra.mrb[0].mxu0 %v1649
        %v1772 = vpop.f32.mrb[0].mxu0
        %v1773 = vadd.f32 %v1653, %v1772
        %v1774 = vpop.f32.mrb[0].mxu0
        %v1775 = vadd.f32 %v1657, %v1774
        %v1776 = vpop.f32.mrb[0].mxu0
        %v1777 = vadd.f32 %v1653, %v1776
        %v1778 = vpop.f32.mrb[0].mxu0
        %v1779 = vadd.f32 %v1657, %v1778
        %1780 = vdwg.mxu0
        %v1781 = vmax.f32 %v1773, 0.0
        %v1782 = vmax.f32 %v1775, 0.0
        %v1783 = vmax.f32 %v1777, 0.0
        %v1784 = vmax.f32 %v1779, 0.0
        %v1785 = vpack.c.bf16 %v1783, %v1781
        %v1786 = vpack.c.bf16 %v1784, %v1782
        %v1787 = vlaneseq
        %v1788 = vshrl.u32 %v1787, 7
        %v1789 = vsub.s32 3, %v1788
        %v1790 = vrot.slane %v385, %v1789
        %v1823 = vunpack.c.l.b16 %v353
        %v1824 = vunpack.c.l.b16 %v354
        %v1825 = vunpack.c.l.b16 %v355
        %v1826 = vunpack.c.l.b16 %v356
        %v1827 = vunpack.c.l.b16 %v357
        %v1828 = vunpack.c.l.b16 %v358
        %v1829 = vunpack.c.l.b16 %v359
        %v1830 = vunpack.c.l.b16 %v360
        %v1831 = vunpack.c.l.b16 %v361
        %v1832 = vunpack.c.l.b16 %v362
        %v1833 = vunpack.c.l.b16 %v363
        %v1834 = vunpack.c.l.b16 %v364
        %v1835 = vunpack.c.l.b16 %v365
        %v1836 = vunpack.c.l.b16 %v366
        %v1837 = vunpack.c.l.b16 %v367
        %v1838 = vunpack.c.l.b16 %v368
        %v1839 = vunpack.c.l.b16 %v369
        %v1840 = vunpack.c.l.b16 %v370
        %v1841 = vunpack.c.l.b16 %v371
        %v1842 = vunpack.c.l.b16 %v372
        %v1843 = vunpack.c.l.b16 %v373
        %v1844 = vunpack.c.l.b16 %v374
        %v1845 = vunpack.c.l.b16 %v375
        %v1846 = vunpack.c.l.b16 %v376
        %v1847 = vunpack.c.l.b16 %v377
        %v1848 = vunpack.c.l.b16 %v378
        %v1849 = vunpack.c.l.b16 %v379
        %v1850 = vunpack.c.l.b16 %v380
        %v1851 = vunpack.c.l.b16 %v381
        %v1852 = vunpack.c.l.b16 %v382
        %v1853 = vunpack.c.l.b16 %v383
        %v1854 = vunpack.c.l.b16 %v384
        %v1855 = vpack.c.b16 %v1824, %v1823
        %v1856 = vpack.c.b16 %v1826, %v1825
        %v1857 = vpack.c.b16 %v1828, %v1827
        %v1858 = vpack.c.b16 %v1830, %v1829
        %v1859 = vpack.c.b16 %v1832, %v1831
        %v1860 = vpack.c.b16 %v1834, %v1833
        %v1861 = vpack.c.b16 %v1836, %v1835
        %v1862 = vpack.c.b16 %v1838, %v1837
        %v1863 = vpack.c.b16 %v1840, %v1839
        %v1864 = vpack.c.b16 %v1842, %v1841
        %v1865 = vpack.c.b16 %v1844, %v1843
        %v1866 = vpack.c.b16 %v1846, %v1845
        %v1867 = vpack.c.b16 %v1848, %v1847
        %v1868 = vpack.c.b16 %v1850, %v1849
        %v1869 = vpack.c.b16 %v1852, %v1851
        %v1870 = vpack.c.b16 %v1854, %v1853
        %1887 = vmatprep.subr.bf16.mxu0 0
        %1888 = vmatpush1.bf16.msra.mxu0 %v1855
        %1889 = vmatprep.subr.bf16.mxu0 0
        %1890 = vmatpush1.bf16.msra.mxu0 %v1856
        %1891 = vmatprep.subr.bf16.mxu0 0
        %1892 = vmatpush1.bf16.msra.mxu0 %v1857
        %1893 = vmatprep.subr.bf16.mxu0 0
        %1894 = vmatpush1.bf16.msra.mxu0 %v1858
        %1895 = vmatprep.subr.bf16.mxu0 0
        %1896 = vmatpush1.bf16.msra.mxu0 %v1859
        %1897 = vmatprep.subr.bf16.mxu0 0
        %1898 = vmatpush1.bf16.msra.mxu0 %v1860
        %1899 = vmatprep.subr.bf16.mxu0 0
        %1900 = vmatpush1.bf16.msra.mxu0 %v1861
        %1901 = vmatprep.subr.bf16.mxu0 0
        %1902 = vmatpush1.bf16.msra.mxu0 %v1862
        %1903 = vmatprep.subr.bf16.mxu0 0
        %1904 = vmatpush1.bf16.msra.mxu0 %v1863
        %1905 = vmatprep.subr.bf16.mxu0 0
        %1906 = vmatpush1.bf16.msra.mxu0 %v1864
        %1907 = vmatprep.subr.bf16.mxu0 0
        %1908 = vmatpush1.bf16.msra.mxu0 %v1865
        %1909 = vmatprep.subr.bf16.mxu0 0
        %1910 = vmatpush1.bf16.msra.mxu0 %v1866
        %1911 = vmatprep.subr.bf16.mxu0 0
        %1912 = vmatpush1.bf16.msra.mxu0 %v1867
        %1913 = vmatprep.subr.bf16.mxu0 0
        %1914 = vmatpush1.bf16.msra.mxu0 %v1868
        %1915 = vmatprep.subr.bf16.mxu0 0
        %1916 = vmatpush1.bf16.msra.mxu0 %v1869
        %1917 = vmatprep.subr.bf16.mxu0 0
        %1918 = vmatpush1.bf16.msra.mxu0 %v1870
        %1919 = vmatprep.mubr.bf16.mxu0 %v1786
        %1920 = vmatmul.mubr.bf16.gmra.mrb[0].mxu0 %v1785
        %v1921 = vpop.f32.mrb[0].mxu0
        %v1922 = vadd.f32 %v1790, %v1921
        %v1923 = vpop.f32.mrb[0].mxu0
        %v1924 = vpop.f32.mrb[0].mxu0
        %v1925 = vadd.f32 %v1790, %v1924
        %v1926 = vpop.f32.mrb[0].mxu0
        %1927 = vdwg.mxu0
        %v1928 = vadd.f32 %v1647, %v1922
        %v1929 = vadd.f32 %v1648, %v1925
        %1930 = vadd.xlane.f32.xlu0 %v1928
        %v1931 = vpop.xlane.xlu0 %1930
        %1932 = vadd.xlane.f32.xlu0 %v1929
        %v1933 = vpop.xlane.xlu0 %1932
        %v1934 = vmul.f32 %v1931, %v1618
        %v1935 = vmul.f32 %v1933, %v1618
        %v1936 = vsub.f32 %v1928, %v1934
        %v1937 = vsub.f32 %v1929, %v1935
        %v1938 = vmul.f32 %v1936, %v1936
        %v1939 = vmul.f32 %v1937, %v1937
        %1940 = vadd.xlane.f32.xlu0 %v1938
        %v1941 = vpop.xlane.xlu0 %1940
        %1942 = vadd.xlane.f32.xlu0 %v1939
        %v1943 = vpop.xlane.xlu0 %1942
        %v1944 = vmul.f32 %v1941, %v1618
        %v1945 = vmul.f32 %v1943, %v1618
        %v1946 = vadd.f32 %v1944, 1e-05
        %v1947 = vadd.f32 %v1945, 1e-05
        %v1948 = vrsqrt.pop %v1946
        %v1949 = vrsqrt.pop %v1947
        %v1950 = vmul.f32 %v1936, %v1948
        %v1951 = vmul.f32 %v1937, %v1949
        %v1952 = vlaneseq
        %v1953 = vshrl.u32 %v1952, 7
        %v1954 = vsub.s32 3, %v1953
        %v1955 = vrot.slane %v386, %v1954
        %v1956 = vmul.f32 %v1950, %v1955
        %v1957 = vmul.f32 %v1951, %v1955
        %v1958 = vlaneseq
        %v1959 = vshrl.u32 %v1958, 7
        %v1960 = vsub.s32 3, %v1959
        %v1961 = vrot.slane %v387, %v1960
        %v1962 = vadd.f32 %v1956, %v1961
        %v1963 = vadd.f32 %v1957, %v1961
        %1964 = vst [vmem:[#allocation2] sm:$0xff] %v1962
        %1965 = vst [vmem:[#allocation2 + $0x8] sm:$0xff] %v1963
        %1966 = vst [vmem:[#allocation11] sm:$0xff] %v1962
        %1967 = vst [vmem:[#allocation11 + $0x8] sm:$0xff] %v1963
        // Predicated region
        $region57: #{seq2seq_forward.1} parent=35 // pred_check
          %p1968 = pneg %p135
        $region58: #{seq2seq_forward.1} parent=35 // pred_check_branch
          %1970 = sbr.rel (%p1968) target = $region60
        $region59: #{seq2seq_forward.1} parent=35 // pred_region
          %s1972 = ssub.s32 256, 256
          %1973 = vsyncadd [#allocation5], %s1972
          %s1974 = sshll.u32 [#allocation11], 4
          %s1975 = int_to_ptr.vmem [resolvable:$true] %s1974
          %1980 = dma.vmem_to_hbm [thread:$0]  %s1975, 256, %s4, [#allocation5], 128, 128, 8
        $region60: #{seq2seq_forward.1} parent=35 // pred_fallthru
          _
        // Predicated region
        $region61: #{seq2seq_forward.1} parent=35 // pred_check
          %p1981 = pneg %p135
        $region62: #{seq2seq_forward.1} parent=35 // pred_check_branch
          %1983 = sbr.rel (%p1981) target = $region64
        $region63: #{seq2seq_forward.1} parent=35 // pred_region
          %1984 = dma.done [#allocation5], 256
        $region64: #{seq2seq_forward.1} parent=35 // pred_fallthru
          _
      $region36: #{seq2seq_forward.1} parent=5 // pred_fallthru
        _
      %p1985 = scmp.le.s32.totalorder 2, %s18
      // Predicated region
      $region65: #{seq2seq_forward.1} parent=5 // pred_check
        %p1986 = pneg %p1985
      $region66: #{seq2seq_forward.1} parent=5 // pred_check_branch
        %1988 = sbr.rel (%p1986) target = $region68
      $region67: #{seq2seq_forward.1} parent=5 // pred_region
        %s1989 = ssub.s32 %s18, 2
      $region68: #{seq2seq_forward.1} parent=5 // pred_fallthru
        _
    $region6: #{seq2seq_forward.1} parent=1 // loop_footer
      %s22 = sadd.s32 1, %s18
    $region7: #{seq2seq_forward.1} parent=1 // loop_footer_branch
      %17 = sbr.rel target = $region3
    $region8: #{seq2seq_forward.1} parent=1 // loop_exit
      _
    %1990 = vsyncpa [#allocation4], 1
    %s1991 = scalar_lea.sflag [#allocation4], 1
    %1992 = vsyncpa %s1991, 1
    %1993 = vsyncpa [#allocation7], 1
    %s1994 = scalar_lea.sflag [#allocation7], 1
    %1995 = vsyncpa %s1994, 1
    %1996 = vsyncpa [#allocation10], 1
    %s1997 = scalar_lea.sflag [#allocation10], 1
    %1998 = vsyncpa %s1997, 1
    %1999 = vsyncpa [#allocation5], 1
    %s2000 = scalar_lea.sflag [#allocation5], 1
    %2001 = vsyncpa %s2000, 1

</llo_original>
